<compile_context>
chip_gen: v5e
topology: v5e:2x2
jax: 0.10.0
libtpu: 0.0.40
codegen_flags: <defaults>
</compile_context>

<pallas_src>
import functools
import math

import jax
import jax.numpy as jnp
from jax import lax
from jax.experimental import pallas as pl
from jax.experimental.pallas import tpu as pltpu

_DEG2RAD = math.pi / 180.0
_RAD2DEG = 180.0 / math.pi

# Reciprocals of constant divisors (turn EUP divides into VPU multiplies).
_INV_1_055 = 1.0 / 1.055
_INV_12_92 = 1.0 / 12.92
_INV_XN = 1.0 / 0.95047
_INV_ZN = 1.0 / 1.08883
_INV_25 = 1.0 / 25.0
_POW25_7 = 25.0 ** 7

# Angle-addition constants for the T term's fixed phase offsets.
_COS30 = math.cos(math.radians(30.0))
_SIN30 = math.sin(math.radians(30.0))
_COS6 = math.cos(math.radians(6.0))
_SIN6 = math.sin(math.radians(6.0))
_COS63 = math.cos(math.radians(63.0))
_SIN63 = math.sin(math.radians(63.0))


def _ceil_div(a, b):
    return -(-a // b)


def _srgb_to_linear(c):
    # kornia.color.rgb_to_linear_rgb; pow(x, 2.4) written as exp(2.4*log(x))
    # on the strictly positive argument (c >= 0 -> (c+0.055)/1.055 > 0).
    t = (c + 0.055) * _INV_1_055
    p = jnp.exp(2.4 * jnp.log(jnp.maximum(t, 1e-12)))
    return jnp.where(c > 0.04045, p, c * _INV_12_92)


def _lab_f(t):
    thr = 0.008856
    # cube root as exp(log/3) on the clamped positive argument.
    p = jnp.exp((1.0 / 3.0) * jnp.log(jnp.maximum(t, thr)))
    return jnp.where(t > thr, p, 7.787 * t + 4.0 / 29.0)


def _rgb_to_lab(r, g, b):
    # kornia.color.rgb_to_lab (sRGB -> linear RGB -> XYZ (D65) -> Lab)
    rl = _srgb_to_linear(r)
    gl = _srgb_to_linear(g)
    bl = _srgb_to_linear(b)

    x = 0.412453 * rl + 0.357580 * gl + 0.180423 * bl
    y = 0.212671 * rl + 0.715160 * gl + 0.072169 * bl
    z = 0.019334 * rl + 0.119193 * gl + 0.950227 * bl

    fx = _lab_f(x * _INV_XN)
    fy = _lab_f(y)
    fz = _lab_f(z * _INV_ZN)

    L = 116.0 * fy - 16.0
    a = 500.0 * (fx - fy)
    bb = 200.0 * (fy - fz)
    return L, a, bb


def _delta_e_kernel(x_ref, y_ref, out_ref, *, inv_k_l, inv_k_c, inv_k_h,
                    strip, n_strips):
    # x_ref, y_ref: (1, 3, TM, 128) RGB tiles of one image.
    # out_ref:      (1, 1, 8, 128) per-tile partial-sum block (unique per grid
    #               point -> no cross-step dependency, both grid axes parallel).

    def strip_partial(s):
        off = pl.multiple_of(s * strip, strip)
        sl = pl.ds(off, strip)
        # Read channels directly from the refs (no whole-tile materialization).
        r1 = x_ref[0, 0, sl, :]
        g1 = x_ref[0, 1, sl, :]
        b1 = x_ref[0, 2, sl, :]
        r2 = y_ref[0, 0, sl, :]
        g2 = y_ref[0, 1, sl, :]
        b2 = y_ref[0, 2, sl, :]

        L1, A1, B1 = _rgb_to_lab(r1, g1, b1)
        L2, A2, B2 = _rgb_to_lab(r2, g2, b2)

        avg_Lp = (L1 + L2) * 0.5
        C1 = jnp.sqrt(A1 * A1 + B1 * B1)
        C2 = jnp.sqrt(A2 * A2 + B2 * B2)
        avg_C1_C2 = (C1 + C2) * 0.5
        c7 = avg_C1_C2 ** 7
        G = 0.5 * (1.0 - jnp.sqrt(
            c7 * pl.reciprocal(c7 + _POW25_7, approx=True) + 1e-08))
        a1p = A1 * (1.0 + G)
        a2p = A2 * (1.0 + G)
        C1p = jnp.sqrt(a1p * a1p + B1 * B1)
        C2p = jnp.sqrt(a2p * a2p + B2 * B2)
        avg_C1p_C2p = (C1p + C2p) * 0.5

        h1p = jnp.arctan2(B1, a1p) * _RAD2DEG
        h1p = jnp.where(h1p < 0.0, h1p + 360.0, h1p)
        h2p = jnp.arctan2(B2, a2p) * _RAD2DEG
        h2p = jnp.where(h2p < 0.0, h2p + 360.0, h2p)

        hsum = h1p + h2p
        avg_Hp = jnp.where(jnp.abs(h1p - h2p) > 180.0, hsum + 360.0, hsum) * 0.5

        # T via 1 cos + 1 sin (EUP) and multiple-angle / angle-addition
        # identities (VPU).
        theta = avg_Hp * _DEG2RAD
        c1t = jnp.cos(theta)
        s1t = jnp.sin(theta)
        c2t = 2.0 * c1t * c1t - 1.0          # cos(2t)
        s2t = 2.0 * s1t * c1t                # sin(2t)
        c3t = c2t * c1t - s2t * s1t          # cos(3t)
        s3t = s2t * c1t + c2t * s1t          # sin(3t)
        c4t = 2.0 * c2t * c2t - 1.0          # cos(4t)
        s4t = 2.0 * s2t * c2t                # sin(4t)

        T = (1.0
             - 0.17 * (c1t * _COS30 + s1t * _SIN30)   # cos(t - 30deg)
             + 0.24 * c2t                             # cos(2t)
             + 0.32 * (c3t * _COS6 - s3t * _SIN6)     # cos(3t + 6deg)
             - 0.2 * (c4t * _COS63 + s4t * _SIN63))   # cos(4t - 63deg)

        dh = h2p - h1p
        delta_hp = jnp.where(jnp.abs(dh) > 180.0, dh + 360.0, dh)
        # Faithful to the reference (subtracts 720 whenever h2p > h1p).
        delta_hp = jnp.where(h2p > h1p, delta_hp - 720.0, delta_hp)

        delta_Lp = L2 - L1
        delta_Cp = C2p - C1p
        delta_Hp = 2.0 * jnp.sqrt(C1p * C2p) * jnp.sin(delta_hp * (_DEG2RAD * 0.5))

        d2 = (avg_Lp - 50.0) ** 2
        S_L = 1.0 + 0.015 * d2 * lax.rsqrt(20.0 + d2)
        S_C = 1.0 + 0.045 * avg_C1p_C2p
        S_H = 1.0 + 0.015 * avg_C1p_C2p * T

        delta_ro = 30.0 * jnp.exp(-(((avg_Hp - 275.0) * _INV_25) ** 2))
        cp7 = avg_C1p_C2p ** 7
        R_C = jnp.sqrt(cp7 * pl.reciprocal(cp7 + _POW25_7, approx=True))
        R_T = -2.0 * R_C * jnp.sin(2.0 * (delta_ro * _DEG2RAD))

        tl = delta_Lp * inv_k_l * pl.reciprocal(S_L, approx=True)
        tc = delta_Cp * inv_k_c * pl.reciprocal(S_C, approx=True)
        th = delta_Hp * inv_k_h * pl.reciprocal(S_H, approx=True)
        delta_E = jnp.sqrt(tl * tl + tc * tc + th * th + R_T * tc * th)

        # Lane-aligned pairwise reduction (strip, 128) -> (8, 128): pure VPU
        # adds on tile-aligned static slices; no cross-lane XLU work.
        parts = [delta_E[8 * j:8 * (j + 1)] for j in range(strip // 8)]
        while len(parts) > 1:
            nxt = [a + b for a, b in zip(parts[0::2], parts[1::2])]
            if len(parts) % 2:
                nxt.append(parts[-1])
            parts = nxt
        return parts[0]

    acc = lax.fori_loop(
        0, n_strips,
        lambda s, acc: acc + strip_partial(s),
        jnp.zeros((8, 128), jnp.float32),
        unroll=True)
    out_ref[...] = acc[None, None, :, :]


def delta_e_2000(x, x_hat, k_l=1.0, k_c=1.0, k_h=1.0, tile_rows=512,
                 strip_rows=64):
    """x, x_hat: (B, 3, H, W) float32 RGB in [0,1]. Returns scalar mean deltaE2000."""
    B, C, H, W = x.shape
    assert C == 3, "DeltaE2000 expects RGB inputs (C == 3)"
    lane = 128
    hw = H * W
    n = B * hw

    m_img = _ceil_div(hw, lane)                   # 128-pixel rows per image
    strip = strip_rows
    if m_img <= strip:
        tm = max(8, _ceil_div(m_img, 8) * 8)      # small image: single strip
        strip = tm
    else:
        tile_rows = max(strip, (tile_rows // strip) * strip)
        tm = min(tile_rows, _ceil_div(m_img, strip) * strip)
    n_strips = tm // strip
    m_pad = _ceil_div(m_img, tm) * tm
    hw_pad = m_pad * lane
    n_tiles = m_pad // tm

    def to_slab(img):
        flat = img.reshape(B, 3, hw).astype(jnp.float32)
        if hw_pad != hw:
            # Zero-padded pixels yield delta_E == 0 exactly (both inputs zero),
            # so no validity mask is needed.
            flat = jnp.pad(flat, ((0, 0), (0, 0), (0, hw_pad - hw)))
        return flat.reshape(B, 3, m_pad, lane)

    xs = to_slab(x)
    ys = to_slab(x_hat)

    kernel = functools.partial(
        _delta_e_kernel,
        inv_k_l=1.0 / float(k_l), inv_k_c=1.0 / float(k_c),
        inv_k_h=1.0 / float(k_h), strip=strip, n_strips=n_strips)

    partials = pl.pallas_call(
        kernel,
        out_shape=jax.ShapeDtypeStruct((B, n_tiles, 8, lane), jnp.float32),
        grid_spec=pltpu.PrefetchScalarGridSpec(
            num_scalar_prefetch=0,
            grid=(B, n_tiles),
            in_specs=[
                pl.BlockSpec((1, 3, tm, lane), lambda b, t: (b, 0, t, 0)),
                pl.BlockSpec((1, 3, tm, lane), lambda b, t: (b, 0, t, 0)),
            ],
            out_specs=pl.BlockSpec((1, 1, 8, lane), lambda b, t: (b, t, 0, 0)),
        ),
        compiler_params=pltpu.CompilerParams(
            dimension_semantics=("parallel", "parallel"),
            vmem_limit_bytes=32 * 1024 * 1024,
        ),
    )(xs, ys)
    # Tiny final cross-lane collapse + mean in plain JAX.
    return jnp.sum(partials) / jnp.float32(n)


def _reference_delta_e(x, x_hat, k_l=1.0, k_c=1.0, k_h=1.0):
    """Pure-jnp literal transcription of the PyTorch module (for self-check)."""
    def srgb_to_linear(c):
        return jnp.where(c > 0.04045, ((c + 0.055) / 1.055) ** 2.4, c / 12.92)

    def rgb_to_lab(img):
        rl = srgb_to_linear(img[:, 0])
        gl = srgb_to_linear(img[:, 1])
        bl = srgb_to_linear(img[:, 2])
        X = 0.412453 * rl + 0.357580 * gl + 0.180423 * bl
        Y = 0.212671 * rl + 0.715160 * gl + 0.072169 * bl
        Z = 0.019334 * rl + 0.119193 * gl + 0.950227 * bl
        xn, yn, zn = X / 0.95047, Y / 1.0, Z / 1.08883

        def f(t):
            return jnp.where(t > 0.008856,
                             jnp.maximum(t, 0.008856) ** (1.0 / 3.0),
                             7.787 * t + 4.0 / 29.0)

        fx, fy, fz = f(xn), f(yn), f(zn)
        return 116.0 * fy - 16.0, 500.0 * (fx - fy), 200.0 * (fy - fz)

    l_1, a_1, b_1 = rgb_to_lab(x)
    l_2, a_2, b_2 = rgb_to_lab(x_hat)
    avg_Lp = (l_1 + l_2) / 2
    C1 = jnp.sqrt(a_1 ** 2 + b_1 ** 2)
    C2 = jnp.sqrt(a_2 ** 2 + b_2 ** 2)
    avg_C1_C2 = (C1 + C2) / 2
    G = 0.5 * (1 - jnp.sqrt(avg_C1_C2 ** 7 / (avg_C1_C2 ** 7 + 25.0 ** 7) + 1e-08))
    a1p = a_1 * (1 + G)
    a2p = a_2 * (1 + G)
    C1p = jnp.sqrt(a1p ** 2 + b_1 ** 2)
    C2p = jnp.sqrt(a2p ** 2 + b_2 ** 2)
    avg_C1p_C2p = (C1p + C2p) / 2
    h1p = jnp.degrees(jnp.arctan2(b_1, a1p))
    h1p = h1p + (h1p < 0) * 360.0
    h2p = jnp.degrees(jnp.arctan2(b_2, a2p))
    h2p = h2p + (h2p < 0) * 360.0
    avg_Hp = ((jnp.abs(h1p - h2p) > 180) * 360.0 + h1p + h2p) / 2
    T = (1 - 0.17 * jnp.cos(jnp.radians(avg_Hp - 30))
         + 0.24 * jnp.cos(jnp.radians(2 * avg_Hp))
         + 0.32 * jnp.cos(jnp.radians(3 * avg_Hp + 6))
         - 0.2 * jnp.cos(jnp.radians(4 * avg_Hp - 63)))
    diff_h2p_h1p = h2p - h1p
    delta_hp = diff_h2p_h1p + (jnp.abs(diff_h2p_h1p) > 180) * 360.0
    delta_hp = delta_hp - (h2p > h1p) * 720.0
    delta_Lp = l_2 - l_1
    delta_Cp = C2p - C1p
    delta_Hp = 2 * jnp.sqrt(C1p * C2p) * jnp.sin(jnp.radians(delta_hp) / 2)
    S_L = 1 + 0.015 * (avg_Lp - 50) ** 2 / jnp.sqrt(20 + (avg_Lp - 50) ** 2)
    S_C = 1 + 0.045 * avg_C1p_C2p
    S_H = 1 + 0.015 * avg_C1p_C2p * T
    delta_ro = 30 * jnp.exp(-((avg_Hp - 275) / 25) ** 2)
    R_C = jnp.sqrt(avg_C1p_C2p ** 7 / (avg_C1p_C2p ** 7 + 25.0 ** 7))
    R_T = -2 * R_C * jnp.sin(2 * jnp.radians(delta_ro))
    delta_E = jnp.sqrt((delta_Lp / (k_l * S_L)) ** 2 + (delta_Cp / (k_c * S_C)) ** 2
                       + (delta_Hp / (k_h * S_H)) ** 2
                       + R_T * (delta_Cp / (k_c * S_C)) * (delta_Hp / (k_h * S_H)))
    return delta_E.mean()


if __name__ == "__main__":
    key = jax.random.PRNGKey(0)
    k1, k2 = jax.random.split(key)
    B, C, H, W = 2, 3, 16, 16
    x = jax.random.uniform(k1, (B, C, H, W), dtype=jnp.float32)
    x_hat = jax.random.uniform(k2, (B, C, H, W), dtype=jnp.float32)

    out = delta_e_2000(x, x_hat)
    ref = _reference_delta_e(x, x_hat)
    out, ref = jax.block_until_ready((out, ref))

    out_f, ref_f = float(out), float(ref)
    assert math.isfinite(out_f), out_f
    assert abs(out_f - ref_f) <= 5e-3 * max(1.0, abs(ref_f)), (out_f, ref_f)
    print("KERNEL_OK")
</pallas_src>

<mosaic_0001>
module attributes {stable_mosaic.version = 11 : i64} {
  func.func @_delta_e_kernel(%arg0: i32, %arg1: i32, %arg2: memref<1x3x8x128xf32, #tpu.memory_space<vmem>>, %arg3: memref<1x3x8x128xf32, #tpu.memory_space<vmem>>, %arg4: memref<1x1x8x128xf32, #tpu.memory_space<vmem>>) attributes {dimension_semantics = [#tpu.dimension_semantics<parallel>, #tpu.dimension_semantics<parallel>], iteration_bounds = array<i64: 2, 1>, scalar_prefetch = 0 : i64, scratch_operands = 0 : i64, tpu.core_type = #tpu.core_type<tc>, window_params = [{transform_indices = @transform_0, window_bounds = array<i64: 1, 3, 8, 128>}, {transform_indices = @transform_1, window_bounds = array<i64: 1, 3, 8, 128>}, {transform_indices = @transform_2, window_bounds = array<i64: 1, 1, 8, 128>}]} {
    %cst = arith.constant 0.000000e+00 : f32
    %0 = vector.broadcast %cst : f32 to vector<8x128xf32>
    %c0_i32 = arith.constant 0 : i32
    %c8_i32 = arith.constant 8 : i32
    %1 = arith.muli %c0_i32, %c8_i32 : i32
    %2 = tpu.assume_multiple %1, 8 : i32
    %c0 = arith.constant 0 : index
    %c0_0 = arith.constant 0 : index
    %3 = arith.index_cast %2 : i32 to index
    %c0_1 = arith.constant 0 : index
    %4 = vector.load %arg2[%c0, %c0_0, %3, %c0_1] : memref<1x3x8x128xf32, #tpu.memory_space<vmem>>, vector<1x1x8x128xf32>
    %5 = vector.shape_cast %4 : vector<1x1x8x128xf32> to vector<8x128xf32>
    %c0_2 = arith.constant 0 : index
    %c1 = arith.constant 1 : index
    %6 = arith.index_cast %2 : i32 to index
    %c0_3 = arith.constant 0 : index
    %7 = vector.load %arg2[%c0_2, %c1, %6, %c0_3] : memref<1x3x8x128xf32, #tpu.memory_space<vmem>>, vector<1x1x8x128xf32>
    %8 = vector.shape_cast %7 : vector<1x1x8x128xf32> to vector<8x128xf32>
    %c0_4 = arith.constant 0 : index
    %c2 = arith.constant 2 : index
    %9 = arith.index_cast %2 : i32 to index
    %c0_5 = arith.constant 0 : index
    %10 = vector.load %arg2[%c0_4, %c2, %9, %c0_5] : memref<1x3x8x128xf32, #tpu.memory_space<vmem>>, vector<1x1x8x128xf32>
    %11 = vector.shape_cast %10 : vector<1x1x8x128xf32> to vector<8x128xf32>
    %c0_6 = arith.constant 0 : index
    %c0_7 = arith.constant 0 : index
    %12 = arith.index_cast %2 : i32 to index
    %c0_8 = arith.constant 0 : index
    %13 = vector.load %arg3[%c0_6, %c0_7, %12, %c0_8] : memref<1x3x8x128xf32, #tpu.memory_space<vmem>>, vector<1x1x8x128xf32>
    %14 = vector.shape_cast %13 : vector<1x1x8x128xf32> to vector<8x128xf32>
    %c0_9 = arith.constant 0 : index
    %c1_10 = arith.constant 1 : index
    %15 = arith.index_cast %2 : i32 to index
    %c0_11 = arith.constant 0 : index
    %16 = vector.load %arg3[%c0_9, %c1_10, %15, %c0_11] : memref<1x3x8x128xf32, #tpu.memory_space<vmem>>, vector<1x1x8x128xf32>
    %17 = vector.shape_cast %16 : vector<1x1x8x128xf32> to vector<8x128xf32>
    %c0_12 = arith.constant 0 : index
    %c2_13 = arith.constant 2 : index
    %18 = arith.index_cast %2 : i32 to index
    %c0_14 = arith.constant 0 : index
    %19 = vector.load %arg3[%c0_12, %c2_13, %18, %c0_14] : memref<1x3x8x128xf32, #tpu.memory_space<vmem>>, vector<1x1x8x128xf32>
    %20 = vector.shape_cast %19 : vector<1x1x8x128xf32> to vector<8x128xf32>
    %cst_15 = arith.constant 5.500000e-02 : f32
    %21 = vector.broadcast %cst_15 : f32 to vector<8x128xf32>
    %22 = arith.addf %5, %21 : vector<8x128xf32>
    %cst_16 = arith.constant 0.947867274 : f32
    %23 = vector.broadcast %cst_16 : f32 to vector<8x128xf32>
    %24 = arith.mulf %22, %23 : vector<8x128xf32>
    %cst_17 = arith.constant 9.99999996E-13 : f32
    %25 = vector.broadcast %cst_17 : f32 to vector<8x128xf32>
    %26 = arith.maximumf %24, %25 : vector<8x128xf32>
    %27 = math.log %26 : vector<8x128xf32>
    %cst_18 = arith.constant 2.400000e+00 : f32
    %28 = vector.broadcast %cst_18 : f32 to vector<8x128xf32>
    %29 = arith.mulf %28, %27 : vector<8x128xf32>
    %30 = math.exp %29 : vector<8x128xf32>
    %cst_19 = arith.constant 4.045000e-02 : f32
    %31 = vector.broadcast %cst_19 : f32 to vector<8x128xf32>
    %32 = arith.cmpf ogt, %5, %31 : vector<8x128xf32>
    %cst_20 = arith.constant 0.0773993805 : f32
    %33 = vector.broadcast %cst_20 : f32 to vector<8x128xf32>
    %34 = arith.mulf %5, %33 : vector<8x128xf32>
    %35 = arith.select %32, %30, %34 : vector<8x128xi1>, vector<8x128xf32>
    %cst_21 = arith.constant 5.500000e-02 : f32
    %36 = vector.broadcast %cst_21 : f32 to vector<8x128xf32>
    %37 = arith.addf %8, %36 : vector<8x128xf32>
    %cst_22 = arith.constant 0.947867274 : f32
    %38 = vector.broadcast %cst_22 : f32 to vector<8x128xf32>
    %39 = arith.mulf %37, %38 : vector<8x128xf32>
    %cst_23 = arith.constant 9.99999996E-13 : f32
    %40 = vector.broadcast %cst_23 : f32 to vector<8x128xf32>
    %41 = arith.maximumf %39, %40 : vector<8x128xf32>
    %42 = math.log %41 : vector<8x128xf32>
    %cst_24 = arith.constant 2.400000e+00 : f32
    %43 = vector.broadcast %cst_24 : f32 to vector<8x128xf32>
    %44 = arith.mulf %43, %42 : vector<8x128xf32>
    %45 = math.exp %44 : vector<8x128xf32>
    %cst_25 = arith.constant 4.045000e-02 : f32
    %46 = vector.broadcast %cst_25 : f32 to vector<8x128xf32>
    %47 = arith.cmpf ogt, %8, %46 : vector<8x128xf32>
    %cst_26 = arith.constant 0.0773993805 : f32
    %48 = vector.broadcast %cst_26 : f32 to vector<8x128xf32>
    %49 = arith.mulf %8, %48 : vector<8x128xf32>
    %50 = arith.select %47, %45, %49 : vector<8x128xi1>, vector<8x128xf32>
    %cst_27 = arith.constant 5.500000e-02 : f32
    %51 = vector.broadcast %cst_27 : f32 to vector<8x128xf32>
    %52 = arith.addf %11, %51 : vector<8x128xf32>
    %cst_28 = arith.constant 0.947867274 : f32
    %53 = vector.broadcast %cst_28 : f32 to vector<8x128xf32>
    %54 = arith.mulf %52, %53 : vector<8x128xf32>
    %cst_29 = arith.constant 9.99999996E-13 : f32
    %55 = vector.broadcast %cst_29 : f32 to vector<8x128xf32>
    %56 = arith.maximumf %54, %55 : vector<8x128xf32>
    %57 = math.log %56 : vector<8x128xf32>
    %cst_30 = arith.constant 2.400000e+00 : f32
    %58 = vector.broadcast %cst_30 : f32 to vector<8x128xf32>
    %59 = arith.mulf %58, %57 : vector<8x128xf32>
    %60 = math.exp %59 : vector<8x128xf32>
    %cst_31 = arith.constant 4.045000e-02 : f32
    %61 = vector.broadcast %cst_31 : f32 to vector<8x128xf32>
    %62 = arith.cmpf ogt, %11, %61 : vector<8x128xf32>
    %cst_32 = arith.constant 0.0773993805 : f32
    %63 = vector.broadcast %cst_32 : f32 to vector<8x128xf32>
    %64 = arith.mulf %11, %63 : vector<8x128xf32>
    %65 = arith.select %62, %60, %64 : vector<8x128xi1>, vector<8x128xf32>
    %cst_33 = arith.constant 4.124530e-01 : f32
    %66 = vector.broadcast %cst_33 : f32 to vector<8x128xf32>
    %67 = arith.mulf %66, %35 : vector<8x128xf32>
    %cst_34 = arith.constant 3.575800e-01 : f32
    %68 = vector.broadcast %cst_34 : f32 to vector<8x128xf32>
    %69 = arith.mulf %68, %50 : vector<8x128xf32>
    %70 = arith.addf %67, %69 : vector<8x128xf32>
    %cst_35 = arith.constant 1.804230e-01 : f32
    %71 = vector.broadcast %cst_35 : f32 to vector<8x128xf32>
    %72 = arith.mulf %71, %65 : vector<8x128xf32>
    %73 = arith.addf %70, %72 : vector<8x128xf32>
    %cst_36 = arith.constant 2.126710e-01 : f32
    %74 = vector.broadcast %cst_36 : f32 to vector<8x128xf32>
    %75 = arith.mulf %74, %35 : vector<8x128xf32>
    %cst_37 = arith.constant 7.151600e-01 : f32
    %76 = vector.broadcast %cst_37 : f32 to vector<8x128xf32>
    %77 = arith.mulf %76, %50 : vector<8x128xf32>
    %78 = arith.addf %75, %77 : vector<8x128xf32>
    %cst_38 = arith.constant 7.216900e-02 : f32
    %79 = vector.broadcast %cst_38 : f32 to vector<8x128xf32>
    %80 = arith.mulf %79, %65 : vector<8x128xf32>
    %81 = arith.addf %78, %80 : vector<8x128xf32>
    %cst_39 = arith.constant 1.933400e-02 : f32
    %82 = vector.broadcast %cst_39 : f32 to vector<8x128xf32>
    %83 = arith.mulf %82, %35 : vector<8x128xf32>
    %cst_40 = arith.constant 1.191930e-01 : f32
    %84 = vector.broadcast %cst_40 : f32 to vector<8x128xf32>
    %85 = arith.mulf %84, %50 : vector<8x128xf32>
    %86 = arith.addf %83, %85 : vector<8x128xf32>
    %cst_41 = arith.constant 9.502270e-01 : f32
    %87 = vector.broadcast %cst_41 : f32 to vector<8x128xf32>
    %88 = arith.mulf %87, %65 : vector<8x128xf32>
    %89 = arith.addf %86, %88 : vector<8x128xf32>
    %cst_42 = arith.constant 1.05211103 : f32
    %90 = vector.broadcast %cst_42 : f32 to vector<8x128xf32>
    %91 = arith.mulf %73, %90 : vector<8x128xf32>
    %cst_43 = arith.constant 8.856000e-03 : f32
    %92 = vector.broadcast %cst_43 : f32 to vector<8x128xf32>
    %93 = arith.maximumf %91, %92 : vector<8x128xf32>
    %94 = math.log %93 : vector<8x128xf32>
    %cst_44 = arith.constant 0.333333343 : f32
    %95 = vector.broadcast %cst_44 : f32 to vector<8x128xf32>
    %96 = arith.mulf %95, %94 : vector<8x128xf32>
    %97 = math.exp %96 : vector<8x128xf32>
    %cst_45 = arith.constant 8.856000e-03 : f32
    %98 = vector.broadcast %cst_45 : f32 to vector<8x128xf32>
    %99 = arith.cmpf ogt, %91, %98 : vector<8x128xf32>
    %cst_46 = arith.constant 7.787000e+00 : f32
    %100 = vector.broadcast %cst_46 : f32 to vector<8x128xf32>
    %101 = arith.mulf %100, %91 : vector<8x128xf32>
    %cst_47 = arith.constant 0.137931034 : f32
    %102 = vector.broadcast %cst_47 : f32 to vector<8x128xf32>
    %103 = arith.addf %101, %102 : vector<8x128xf32>
    %104 = arith.select %99, %97, %103 : vector<8x128xi1>, vector<8x128xf32>
    %cst_48 = arith.constant 8.856000e-03 : f32
    %105 = vector.broadcast %cst_48 : f32 to vector<8x128xf32>
    %106 = arith.maximumf %81, %105 : vector<8x128xf32>
    %107 = math.log %106 : vector<8x128xf32>
    %cst_49 = arith.constant 0.333333343 : f32
    %108 = vector.broadcast %cst_49 : f32 to vector<8x128xf32>
    %109 = arith.mulf %108, %107 : vector<8x128xf32>
    %110 = math.exp %109 : vector<8x128xf32>
    %cst_50 = arith.constant 8.856000e-03 : f32
    %111 = vector.broadcast %cst_50 : f32 to vector<8x128xf32>
    %112 = arith.cmpf ogt, %81, %111 : vector<8x128xf32>
    %cst_51 = arith.constant 7.787000e+00 : f32
    %113 = vector.broadcast %cst_51 : f32 to vector<8x128xf32>
    %114 = arith.mulf %113, %81 : vector<8x128xf32>
    %cst_52 = arith.constant 0.137931034 : f32
    %115 = vector.broadcast %cst_52 : f32 to vector<8x128xf32>
    %116 = arith.addf %114, %115 : vector<8x128xf32>
    %117 = arith.select %112, %110, %116 : vector<8x128xi1>, vector<8x128xf32>
    %cst_53 = arith.constant 0.918417036 : f32
    %118 = vector.broadcast %cst_53 : f32 to vector<8x128xf32>
    %119 = arith.mulf %89, %118 : vector<8x128xf32>
    %cst_54 = arith.constant 8.856000e-03 : f32
    %120 = vector.broadcast %cst_54 : f32 to vector<8x128xf32>
    %121 = arith.maximumf %119, %120 : vector<8x128xf32>
    %122 = math.log %121 : vector<8x128xf32>
    %cst_55 = arith.constant 0.333333343 : f32
    %123 = vector.broadcast %cst_55 : f32 to vector<8x128xf32>
    %124 = arith.mulf %123, %122 : vector<8x128xf32>
    %125 = math.exp %124 : vector<8x128xf32>
    %cst_56 = arith.constant 8.856000e-03 : f32
    %126 = vector.broadcast %cst_56 : f32 to vector<8x128xf32>
    %127 = arith.cmpf ogt, %119, %126 : vector<8x128xf32>
    %cst_57 = arith.constant 7.787000e+00 : f32
    %128 = vector.broadcast %cst_57 : f32 to vector<8x128xf32>
    %129 = arith.mulf %128, %119 : vector<8x128xf32>
    %cst_58 = arith.constant 0.137931034 : f32
    %130 = vector.broadcast %cst_58 : f32 to vector<8x128xf32>
    %131 = arith.addf %129, %130 : vector<8x128xf32>
    %132 = arith.select %127, %125, %131 : vector<8x128xi1>, vector<8x128xf32>
    %cst_59 = arith.constant 1.160000e+02 : f32
    %133 = vector.broadcast %cst_59 : f32 to vector<8x128xf32>
    %134 = arith.mulf %133, %117 : vector<8x128xf32>
    %cst_60 = arith.constant 1.600000e+01 : f32
    %135 = vector.broadcast %cst_60 : f32 to vector<8x128xf32>
    %136 = arith.subf %134, %135 : vector<8x128xf32>
    %137 = arith.subf %104, %117 : vector<8x128xf32>
    %cst_61 = arith.constant 5.000000e+02 : f32
    %138 = vector.broadcast %cst_61 : f32 to vector<8x128xf32>
    %139 = arith.mulf %138, %137 : vector<8x128xf32>
    %140 = arith.subf %117, %132 : vector<8x128xf32>
    %cst_62 = arith.constant 2.000000e+02 : f32
    %141 = vector.broadcast %cst_62 : f32 to vector<8x128xf32>
    %142 = arith.mulf %141, %140 : vector<8x128xf32>
    %cst_63 = arith.constant 5.500000e-02 : f32
    %143 = vector.broadcast %cst_63 : f32 to vector<8x128xf32>
    %144 = arith.addf %14, %143 : vector<8x128xf32>
    %cst_64 = arith.constant 0.947867274 : f32
    %145 = vector.broadcast %cst_64 : f32 to vector<8x128xf32>
    %146 = arith.mulf %144, %145 : vector<8x128xf32>
    %cst_65 = arith.constant 9.99999996E-13 : f32
    %147 = vector.broadcast %cst_65 : f32 to vector<8x128xf32>
    %148 = arith.maximumf %146, %147 : vector<8x128xf32>
    %149 = math.log %148 : vector<8x128xf32>
    %cst_66 = arith.constant 2.400000e+00 : f32
    %150 = vector.broadcast %cst_66 : f32 to vector<8x128xf32>
    %151 = arith.mulf %150, %149 : vector<8x128xf32>
    %152 = math.exp %151 : vector<8x128xf32>
    %cst_67 = arith.constant 4.045000e-02 : f32
    %153 = vector.broadcast %cst_67 : f32 to vector<8x128xf32>
    %154 = arith.cmpf ogt, %14, %153 : vector<8x128xf32>
    %cst_68 = arith.constant 0.0773993805 : f32
    %155 = vector.broadcast %cst_68 : f32 to vector<8x128xf32>
    %156 = arith.mulf %14, %155 : vector<8x128xf32>
    %157 = arith.select %154, %152, %156 : vector<8x128xi1>, vector<8x128xf32>
    %cst_69 = arith.constant 5.500000e-02 : f32
    %158 = vector.broadcast %cst_69 : f32 to vector<8x128xf32>
    %159 = arith.addf %17, %158 : vector<8x128xf32>
    %cst_70 = arith.constant 0.947867274 : f32
    %160 = vector.broadcast %cst_70 : f32 to vector<8x128xf32>
    %161 = arith.mulf %159, %160 : vector<8x128xf32>
    %cst_71 = arith.constant 9.99999996E-13 : f32
    %162 = vector.broadcast %cst_71 : f32 to vector<8x128xf32>
    %163 = arith.maximumf %161, %162 : vector<8x128xf32>
    %164 = math.log %163 : vector<8x128xf32>
    %cst_72 = arith.constant 2.400000e+00 : f32
    %165 = vector.broadcast %cst_72 : f32 to vector<8x128xf32>
    %166 = arith.mulf %165, %164 : vector<8x128xf32>
    %167 = math.exp %166 : vector<8x128xf32>
    %cst_73 = arith.constant 4.045000e-02 : f32
    %168 = vector.broadcast %cst_73 : f32 to vector<8x128xf32>
    %169 = arith.cmpf ogt, %17, %168 : vector<8x128xf32>
    %cst_74 = arith.constant 0.0773993805 : f32
    %170 = vector.broadcast %cst_74 : f32 to vector<8x128xf32>
    %171 = arith.mulf %17, %170 : vector<8x128xf32>
    %172 = arith.select %169, %167, %171 : vector<8x128xi1>, vector<8x128xf32>
    %cst_75 = arith.constant 5.500000e-02 : f32
    %173 = vector.broadcast %cst_75 : f32 to vector<8x128xf32>
    %174 = arith.addf %20, %173 : vector<8x128xf32>
    %cst_76 = arith.constant 0.947867274 : f32
    %175 = vector.broadcast %cst_76 : f32 to vector<8x128xf32>
    %176 = arith.mulf %174, %175 : vector<8x128xf32>
    %cst_77 = arith.constant 9.99999996E-13 : f32
    %177 = vector.broadcast %cst_77 : f32 to vector<8x128xf32>
    %178 = arith.maximumf %176, %177 : vector<8x128xf32>
    %179 = math.log %178 : vector<8x128xf32>
    %cst_78 = arith.constant 2.400000e+00 : f32
    %180 = vector.broadcast %cst_78 : f32 to vector<8x128xf32>
    %181 = arith.mulf %180, %179 : vector<8x128xf32>
    %182 = math.exp %181 : vector<8x128xf32>
    %cst_79 = arith.constant 4.045000e-02 : f32
    %183 = vector.broadcast %cst_79 : f32 to vector<8x128xf32>
    %184 = arith.cmpf ogt, %20, %183 : vector<8x128xf32>
    %cst_80 = arith.constant 0.0773993805 : f32
    %185 = vector.broadcast %cst_80 : f32 to vector<8x128xf32>
    %186 = arith.mulf %20, %185 : vector<8x128xf32>
    %187 = arith.select %184, %182, %186 : vector<8x128xi1>, vector<8x128xf32>
    %cst_81 = arith.constant 4.124530e-01 : f32
    %188 = vector.broadcast %cst_81 : f32 to vector<8x128xf32>
    %189 = arith.mulf %188, %157 : vector<8x128xf32>
    %cst_82 = arith.constant 3.575800e-01 : f32
    %190 = vector.broadcast %cst_82 : f32 to vector<8x128xf32>
    %191 = arith.mulf %190, %172 : vector<8x128xf32>
    %192 = arith.addf %189, %191 : vector<8x128xf32>
    %cst_83 = arith.constant 1.804230e-01 : f32
    %193 = vector.broadcast %cst_83 : f32 to vector<8x128xf32>
    %194 = arith.mulf %193, %187 : vector<8x128xf32>
    %195 = arith.addf %192, %194 : vector<8x128xf32>
    %cst_84 = arith.constant 2.126710e-01 : f32
    %196 = vector.broadcast %cst_84 : f32 to vector<8x128xf32>
    %197 = arith.mulf %196, %157 : vector<8x128xf32>
    %cst_85 = arith.constant 7.151600e-01 : f32
    %198 = vector.broadcast %cst_85 : f32 to vector<8x128xf32>
    %199 = arith.mulf %198, %172 : vector<8x128xf32>
    %200 = arith.addf %197, %199 : vector<8x128xf32>
    %cst_86 = arith.constant 7.216900e-02 : f32
    %201 = vector.broadcast %cst_86 : f32 to vector<8x128xf32>
    %202 = arith.mulf %201, %187 : vector<8x128xf32>
    %203 = arith.addf %200, %202 : vector<8x128xf32>
    %cst_87 = arith.constant 1.933400e-02 : f32
    %204 = vector.broadcast %cst_87 : f32 to vector<8x128xf32>
    %205 = arith.mulf %204, %157 : vector<8x128xf32>
    %cst_88 = arith.constant 1.191930e-01 : f32
    %206 = vector.broadcast %cst_88 : f32 to vector<8x128xf32>
    %207 = arith.mulf %206, %172 : vector<8x128xf32>
    %208 = arith.addf %205, %207 : vector<8x128xf32>
    %cst_89 = arith.constant 9.502270e-01 : f32
    %209 = vector.broadcast %cst_89 : f32 to vector<8x128xf32>
    %210 = arith.mulf %209, %187 : vector<8x128xf32>
    %211 = arith.addf %208, %210 : vector<8x128xf32>
    %cst_90 = arith.constant 1.05211103 : f32
    %212 = vector.broadcast %cst_90 : f32 to vector<8x128xf32>
    %213 = arith.mulf %195, %212 : vector<8x128xf32>
    %cst_91 = arith.constant 8.856000e-03 : f32
    %214 = vector.broadcast %cst_91 : f32 to vector<8x128xf32>
    %215 = arith.maximumf %213, %214 : vector<8x128xf32>
    %216 = math.log %215 : vector<8x128xf32>
    %cst_92 = arith.constant 0.333333343 : f32
    %217 = vector.broadcast %cst_92 : f32 to vector<8x128xf32>
    %218 = arith.mulf %217, %216 : vector<8x128xf32>
    %219 = math.exp %218 : vector<8x128xf32>
    %cst_93 = arith.constant 8.856000e-03 : f32
    %220 = vector.broadcast %cst_93 : f32 to vector<8x128xf32>
    %221 = arith.cmpf ogt, %213, %220 : vector<8x128xf32>
    %cst_94 = arith.constant 7.787000e+00 : f32
    %222 = vector.broadcast %cst_94 : f32 to vector<8x128xf32>
    %223 = arith.mulf %222, %213 : vector<8x128xf32>
    %cst_95 = arith.constant 0.137931034 : f32
    %224 = vector.broadcast %cst_95 : f32 to vector<8x128xf32>
    %225 = arith.addf %223, %224 : vector<8x128xf32>
    %226 = arith.select %221, %219, %225 : vector<8x128xi1>, vector<8x128xf32>
    %cst_96 = arith.constant 8.856000e-03 : f32
    %227 = vector.broadcast %cst_96 : f32 to vector<8x128xf32>
    %228 = arith.maximumf %203, %227 : vector<8x128xf32>
    %229 = math.log %228 : vector<8x128xf32>
    %cst_97 = arith.constant 0.333333343 : f32
    %230 = vector.broadcast %cst_97 : f32 to vector<8x128xf32>
    %231 = arith.mulf %230, %229 : vector<8x128xf32>
    %232 = math.exp %231 : vector<8x128xf32>
    %cst_98 = arith.constant 8.856000e-03 : f32
    %233 = vector.broadcast %cst_98 : f32 to vector<8x128xf32>
    %234 = arith.cmpf ogt, %203, %233 : vector<8x128xf32>
    %cst_99 = arith.constant 7.787000e+00 : f32
    %235 = vector.broadcast %cst_99 : f32 to vector<8x128xf32>
    %236 = arith.mulf %235, %203 : vector<8x128xf32>
    %cst_100 = arith.constant 0.137931034 : f32
    %237 = vector.broadcast %cst_100 : f32 to vector<8x128xf32>
    %238 = arith.addf %236, %237 : vector<8x128xf32>
    %239 = arith.select %234, %232, %238 : vector<8x128xi1>, vector<8x128xf32>
    %cst_101 = arith.constant 0.918417036 : f32
    %240 = vector.broadcast %cst_101 : f32 to vector<8x128xf32>
    %241 = arith.mulf %211, %240 : vector<8x128xf32>
    %cst_102 = arith.constant 8.856000e-03 : f32
    %242 = vector.broadcast %cst_102 : f32 to vector<8x128xf32>
    %243 = arith.maximumf %241, %242 : vector<8x128xf32>
    %244 = math.log %243 : vector<8x128xf32>
    %cst_103 = arith.constant 0.333333343 : f32
    %245 = vector.broadcast %cst_103 : f32 to vector<8x128xf32>
    %246 = arith.mulf %245, %244 : vector<8x128xf32>
    %247 = math.exp %246 : vector<8x128xf32>
    %cst_104 = arith.constant 8.856000e-03 : f32
    %248 = vector.broadcast %cst_104 : f32 to vector<8x128xf32>
    %249 = arith.cmpf ogt, %241, %248 : vector<8x128xf32>
    %cst_105 = arith.constant 7.787000e+00 : f32
    %250 = vector.broadcast %cst_105 : f32 to vector<8x128xf32>
    %251 = arith.mulf %250, %241 : vector<8x128xf32>
    %cst_106 = arith.constant 0.137931034 : f32
    %252 = vector.broadcast %cst_106 : f32 to vector<8x128xf32>
    %253 = arith.addf %251, %252 : vector<8x128xf32>
    %254 = arith.select %249, %247, %253 : vector<8x128xi1>, vector<8x128xf32>
    %cst_107 = arith.constant 1.160000e+02 : f32
    %255 = vector.broadcast %cst_107 : f32 to vector<8x128xf32>
    %256 = arith.mulf %255, %239 : vector<8x128xf32>
    %cst_108 = arith.constant 1.600000e+01 : f32
    %257 = vector.broadcast %cst_108 : f32 to vector<8x128xf32>
    %258 = arith.subf %256, %257 : vector<8x128xf32>
    %259 = arith.subf %226, %239 : vector<8x128xf32>
    %cst_109 = arith.constant 5.000000e+02 : f32
    %260 = vector.broadcast %cst_109 : f32 to vector<8x128xf32>
    %261 = arith.mulf %260, %259 : vector<8x128xf32>
    %262 = arith.subf %239, %254 : vector<8x128xf32>
    %cst_110 = arith.constant 2.000000e+02 : f32
    %263 = vector.broadcast %cst_110 : f32 to vector<8x128xf32>
    %264 = arith.mulf %263, %262 : vector<8x128xf32>
    %265 = arith.addf %136, %258 : vector<8x128xf32>
    %cst_111 = arith.constant 5.000000e-01 : f32
    %266 = vector.broadcast %cst_111 : f32 to vector<8x128xf32>
    %267 = arith.mulf %265, %266 : vector<8x128xf32>
    %268 = arith.mulf %139, %139 : vector<8x128xf32>
    %269 = arith.mulf %142, %142 : vector<8x128xf32>
    %270 = arith.addf %268, %269 : vector<8x128xf32>
    %271 = math.sqrt %270 : vector<8x128xf32>
    %272 = arith.mulf %261, %261 : vector<8x128xf32>
    %273 = arith.mulf %264, %264 : vector<8x128xf32>
    %274 = arith.addf %272, %273 : vector<8x128xf32>
    %275 = math.sqrt %274 : vector<8x128xf32>
    %276 = arith.addf %271, %275 : vector<8x128xf32>
    %cst_112 = arith.constant 5.000000e-01 : f32
    %277 = vector.broadcast %cst_112 : f32 to vector<8x128xf32>
    %278 = arith.mulf %276, %277 : vector<8x128xf32>
    %279 = arith.mulf %278, %278 : vector<8x128xf32>
    %280 = arith.mulf %278, %279 : vector<8x128xf32>
    %281 = arith.mulf %279, %279 : vector<8x128xf32>
    %282 = arith.mulf %280, %281 : vector<8x128xf32>
    %cst_113 = arith.constant 6.10351565E+9 : f32
    %283 = vector.broadcast %cst_113 : f32 to vector<8x128xf32>
    %284 = arith.addf %282, %283 : vector<8x128xf32>
    %285 = tpu.reciprocal %284 {approx = true} : vector<8x128xf32> -> vector<8x128xf32>
    %286 = arith.mulf %282, %285 : vector<8x128xf32>
    %cst_114 = arith.constant 9.99999993E-9 : f32
    %287 = vector.broadcast %cst_114 : f32 to vector<8x128xf32>
    %288 = arith.addf %286, %287 : vector<8x128xf32>
    %289 = math.sqrt %288 : vector<8x128xf32>
    %cst_115 = arith.constant 1.000000e+00 : f32
    %290 = vector.broadcast %cst_115 : f32 to vector<8x128xf32>
    %291 = arith.subf %290, %289 : vector<8x128xf32>
    %cst_116 = arith.constant 5.000000e-01 : f32
    %292 = vector.broadcast %cst_116 : f32 to vector<8x128xf32>
    %293 = arith.mulf %292, %291 : vector<8x128xf32>
    %cst_117 = arith.constant 1.000000e+00 : f32
    %294 = vector.broadcast %cst_117 : f32 to vector<8x128xf32>
    %295 = arith.addf %294, %293 : vector<8x128xf32>
    %296 = arith.mulf %139, %295 : vector<8x128xf32>
    %cst_118 = arith.constant 1.000000e+00 : f32
    %297 = vector.broadcast %cst_118 : f32 to vector<8x128xf32>
    %298 = arith.addf %297, %293 : vector<8x128xf32>
    %299 = arith.mulf %261, %298 : vector<8x128xf32>
    %300 = arith.mulf %296, %296 : vector<8x128xf32>
    %301 = arith.mulf %142, %142 : vector<8x128xf32>
    %302 = arith.addf %300, %301 : vector<8x128xf32>
    %303 = math.sqrt %302 : vector<8x128xf32>
    %304 = arith.mulf %299, %299 : vector<8x128xf32>
    %305 = arith.mulf %264, %264 : vector<8x128xf32>
    %306 = arith.addf %304, %305 : vector<8x128xf32>
    %307 = math.sqrt %306 : vector<8x128xf32>
    %308 = arith.addf %303, %307 : vector<8x128xf32>
    %cst_119 = arith.constant 5.000000e-01 : f32
    %309 = vector.broadcast %cst_119 : f32 to vector<8x128xf32>
    %310 = arith.mulf %308, %309 : vector<8x128xf32>
    %311 = math.atan2 %142, %296 : vector<8x128xf32>
    %cst_120 = arith.constant 57.2957802 : f32
    %312 = vector.broadcast %cst_120 : f32 to vector<8x128xf32>
    %313 = arith.mulf %311, %312 : vector<8x128xf32>
    %cst_121 = arith.constant 0.000000e+00 : f32
    %314 = vector.broadcast %cst_121 : f32 to vector<8x128xf32>
    %315 = arith.cmpf olt, %313, %314 : vector<8x128xf32>
    %cst_122 = arith.constant 3.600000e+02 : f32
    %316 = vector.broadcast %cst_122 : f32 to vector<8x128xf32>
    %317 = arith.addf %313, %316 : vector<8x128xf32>
    %318 = arith.select %315, %317, %313 : vector<8x128xi1>, vector<8x128xf32>
    %319 = math.atan2 %264, %299 : vector<8x128xf32>
    %cst_123 = arith.constant 57.2957802 : f32
    %320 = vector.broadcast %cst_123 : f32 to vector<8x128xf32>
    %321 = arith.mulf %319, %320 : vector<8x128xf32>
    %cst_124 = arith.constant 0.000000e+00 : f32
    %322 = vector.broadcast %cst_124 : f32 to vector<8x128xf32>
    %323 = arith.cmpf olt, %321, %322 : vector<8x128xf32>
    %cst_125 = arith.constant 3.600000e+02 : f32
    %324 = vector.broadcast %cst_125 : f32 to vector<8x128xf32>
    %325 = arith.addf %321, %324 : vector<8x128xf32>
    %326 = arith.select %323, %325, %321 : vector<8x128xi1>, vector<8x128xf32>
    %327 = arith.addf %318, %326 : vector<8x128xf32>
    %328 = arith.subf %318, %326 : vector<8x128xf32>
    %329 = math.absf %328 : vector<8x128xf32>
    %cst_126 = arith.constant 1.800000e+02 : f32
    %330 = vector.broadcast %cst_126 : f32 to vector<8x128xf32>
    %331 = arith.cmpf ogt, %329, %330 : vector<8x128xf32>
    %cst_127 = arith.constant 3.600000e+02 : f32
    %332 = vector.broadcast %cst_127 : f32 to vector<8x128xf32>
    %333 = arith.addf %327, %332 : vector<8x128xf32>
    %334 = arith.select %331, %333, %327 : vector<8x128xi1>, vector<8x128xf32>
    %cst_128 = arith.constant 5.000000e-01 : f32
    %335 = vector.broadcast %cst_128 : f32 to vector<8x128xf32>
    %336 = arith.mulf %334, %335 : vector<8x128xf32>
    %cst_129 = arith.constant 0.0174532924 : f32
    %337 = vector.broadcast %cst_129 : f32 to vector<8x128xf32>
    %338 = arith.mulf %336, %337 : vector<8x128xf32>
    %339 = math.cos %338 : vector<8x128xf32>
    %340 = math.sin %338 : vector<8x128xf32>
    %cst_130 = arith.constant 2.000000e+00 : f32
    %341 = vector.broadcast %cst_130 : f32 to vector<8x128xf32>
    %342 = arith.mulf %341, %339 : vector<8x128xf32>
    %343 = arith.mulf %342, %339 : vector<8x128xf32>
    %cst_131 = arith.constant 1.000000e+00 : f32
    %344 = vector.broadcast %cst_131 : f32 to vector<8x128xf32>
    %345 = arith.subf %343, %344 : vector<8x128xf32>
    %cst_132 = arith.constant 2.000000e+00 : f32
    %346 = vector.broadcast %cst_132 : f32 to vector<8x128xf32>
    %347 = arith.mulf %346, %340 : vector<8x128xf32>
    %348 = arith.mulf %347, %339 : vector<8x128xf32>
    %349 = arith.mulf %345, %339 : vector<8x128xf32>
    %350 = arith.mulf %348, %340 : vector<8x128xf32>
    %351 = arith.subf %349, %350 : vector<8x128xf32>
    %352 = arith.mulf %348, %339 : vector<8x128xf32>
    %353 = arith.mulf %345, %340 : vector<8x128xf32>
    %354 = arith.addf %352, %353 : vector<8x128xf32>
    %cst_133 = arith.constant 2.000000e+00 : f32
    %355 = vector.broadcast %cst_133 : f32 to vector<8x128xf32>
    %356 = arith.mulf %355, %345 : vector<8x128xf32>
    %357 = arith.mulf %356, %345 : vector<8x128xf32>
    %cst_134 = arith.constant 1.000000e+00 : f32
    %358 = vector.broadcast %cst_134 : f32 to vector<8x128xf32>
    %359 = arith.subf %357, %358 : vector<8x128xf32>
    %cst_135 = arith.constant 2.000000e+00 : f32
    %360 = vector.broadcast %cst_135 : f32 to vector<8x128xf32>
    %361 = arith.mulf %360, %348 : vector<8x128xf32>
    %362 = arith.mulf %361, %345 : vector<8x128xf32>
    %cst_136 = arith.constant 0.866025388 : f32
    %363 = vector.broadcast %cst_136 : f32 to vector<8x128xf32>
    %364 = arith.mulf %339, %363 : vector<8x128xf32>
    %cst_137 = arith.constant 5.000000e-01 : f32
    %365 = vector.broadcast %cst_137 : f32 to vector<8x128xf32>
    %366 = arith.mulf %340, %365 : vector<8x128xf32>
    %367 = arith.addf %364, %366 : vector<8x128xf32>
    %cst_138 = arith.constant 1.700000e-01 : f32
    %368 = vector.broadcast %cst_138 : f32 to vector<8x128xf32>
    %369 = arith.mulf %368, %367 : vector<8x128xf32>
    %cst_139 = arith.constant 1.000000e+00 : f32
    %370 = vector.broadcast %cst_139 : f32 to vector<8x128xf32>
    %371 = arith.subf %370, %369 : vector<8x128xf32>
    %cst_140 = arith.constant 2.400000e-01 : f32
    %372 = vector.broadcast %cst_140 : f32 to vector<8x128xf32>
    %373 = arith.mulf %372, %345 : vector<8x128xf32>
    %374 = arith.addf %371, %373 : vector<8x128xf32>
    %cst_141 = arith.constant 0.994521915 : f32
    %375 = vector.broadcast %cst_141 : f32 to vector<8x128xf32>
    %376 = arith.mulf %351, %375 : vector<8x128xf32>
    %cst_142 = arith.constant 0.104528464 : f32
    %377 = vector.broadcast %cst_142 : f32 to vector<8x128xf32>
    %378 = arith.mulf %354, %377 : vector<8x128xf32>
    %379 = arith.subf %376, %378 : vector<8x128xf32>
    %cst_143 = arith.constant 3.200000e-01 : f32
    %380 = vector.broadcast %cst_143 : f32 to vector<8x128xf32>
    %381 = arith.mulf %380, %379 : vector<8x128xf32>
    %382 = arith.addf %374, %381 : vector<8x128xf32>
    %cst_144 = arith.constant 0.453990489 : f32
    %383 = vector.broadcast %cst_144 : f32 to vector<8x128xf32>
    %384 = arith.mulf %359, %383 : vector<8x128xf32>
    %cst_145 = arith.constant 0.891006529 : f32
    %385 = vector.broadcast %cst_145 : f32 to vector<8x128xf32>
    %386 = arith.mulf %362, %385 : vector<8x128xf32>
    %387 = arith.addf %384, %386 : vector<8x128xf32>
    %cst_146 = arith.constant 2.000000e-01 : f32
    %388 = vector.broadcast %cst_146 : f32 to vector<8x128xf32>
    %389 = arith.mulf %388, %387 : vector<8x128xf32>
    %390 = arith.subf %382, %389 : vector<8x128xf32>
    %391 = arith.subf %326, %318 : vector<8x128xf32>
    %392 = math.absf %391 : vector<8x128xf32>
    %cst_147 = arith.constant 1.800000e+02 : f32
    %393 = vector.broadcast %cst_147 : f32 to vector<8x128xf32>
    %394 = arith.cmpf ogt, %392, %393 : vector<8x128xf32>
    %cst_148 = arith.constant 3.600000e+02 : f32
    %395 = vector.broadcast %cst_148 : f32 to vector<8x128xf32>
    %396 = arith.addf %391, %395 : vector<8x128xf32>
    %397 = arith.select %394, %396, %391 : vector<8x128xi1>, vector<8x128xf32>
    %398 = arith.cmpf ogt, %326, %318 : vector<8x128xf32>
    %cst_149 = arith.constant 7.200000e+02 : f32
    %399 = vector.broadcast %cst_149 : f32 to vector<8x128xf32>
    %400 = arith.subf %397, %399 : vector<8x128xf32>
    %401 = arith.select %398, %400, %397 : vector<8x128xi1>, vector<8x128xf32>
    %402 = arith.subf %258, %136 : vector<8x128xf32>
    %403 = arith.subf %307, %303 : vector<8x128xf32>
    %404 = arith.mulf %303, %307 : vector<8x128xf32>
    %405 = math.sqrt %404 : vector<8x128xf32>
    %cst_150 = arith.constant 2.000000e+00 : f32
    %406 = vector.broadcast %cst_150 : f32 to vector<8x128xf32>
    %407 = arith.mulf %406, %405 : vector<8x128xf32>
    %cst_151 = arith.constant 0.00872664619 : f32
    %408 = vector.broadcast %cst_151 : f32 to vector<8x128xf32>
    %409 = arith.mulf %401, %408 : vector<8x128xf32>
    %410 = math.sin %409 : vector<8x128xf32>
    %411 = arith.mulf %407, %410 : vector<8x128xf32>
    %cst_152 = arith.constant 5.000000e+01 : f32
    %412 = vector.broadcast %cst_152 : f32 to vector<8x128xf32>
    %413 = arith.subf %267, %412 : vector<8x128xf32>
    %414 = arith.mulf %413, %413 : vector<8x128xf32>
    %cst_153 = arith.constant 1.500000e-02 : f32
    %415 = vector.broadcast %cst_153 : f32 to vector<8x128xf32>
    %416 = arith.mulf %415, %414 : vector<8x128xf32>
    %cst_154 = arith.constant 2.000000e+01 : f32
    %417 = vector.broadcast %cst_154 : f32 to vector<8x128xf32>
    %418 = arith.addf %417, %414 : vector<8x128xf32>
    %419 = math.rsqrt %418 : vector<8x128xf32>
    %420 = arith.mulf %416, %419 : vector<8x128xf32>
    %cst_155 = arith.constant 1.000000e+00 : f32
    %421 = vector.broadcast %cst_155 : f32 to vector<8x128xf32>
    %422 = arith.addf %421, %420 : vector<8x128xf32>
    %cst_156 = arith.constant 4.500000e-02 : f32
    %423 = vector.broadcast %cst_156 : f32 to vector<8x128xf32>
    %424 = arith.mulf %423, %310 : vector<8x128xf32>
    %cst_157 = arith.constant 1.000000e+00 : f32
    %425 = vector.broadcast %cst_157 : f32 to vector<8x128xf32>
    %426 = arith.addf %425, %424 : vector<8x128xf32>
    %cst_158 = arith.constant 1.500000e-02 : f32
    %427 = vector.broadcast %cst_158 : f32 to vector<8x128xf32>
    %428 = arith.mulf %427, %310 : vector<8x128xf32>
    %429 = arith.mulf %428, %390 : vector<8x128xf32>
    %cst_159 = arith.constant 1.000000e+00 : f32
    %430 = vector.broadcast %cst_159 : f32 to vector<8x128xf32>
    %431 = arith.addf %430, %429 : vector<8x128xf32>
    %cst_160 = arith.constant 2.750000e+02 : f32
    %432 = vector.broadcast %cst_160 : f32 to vector<8x128xf32>
    %433 = arith.subf %336, %432 : vector<8x128xf32>
    %cst_161 = arith.constant 4.000000e-02 : f32
    %434 = vector.broadcast %cst_161 : f32 to vector<8x128xf32>
    %435 = arith.mulf %433, %434 : vector<8x128xf32>
    %436 = arith.mulf %435, %435 : vector<8x128xf32>
    %cst_162 = arith.constant 0.000000e+00 : f32
    %437 = vector.broadcast %cst_162 : f32 to vector<8x128xf32>
    %438 = arith.subf %437, %436 : vector<8x128xf32>
    %439 = math.exp %438 : vector<8x128xf32>
    %cst_163 = arith.constant 3.000000e+01 : f32
    %440 = vector.broadcast %cst_163 : f32 to vector<8x128xf32>
    %441 = arith.mulf %440, %439 : vector<8x128xf32>
    %442 = arith.mulf %310, %310 : vector<8x128xf32>
    %443 = arith.mulf %310, %442 : vector<8x128xf32>
    %444 = arith.mulf %442, %442 : vector<8x128xf32>
    %445 = arith.mulf %443, %444 : vector<8x128xf32>
    %cst_164 = arith.constant 6.10351565E+9 : f32
    %446 = vector.broadcast %cst_164 : f32 to vector<8x128xf32>
    %447 = arith.addf %445, %446 : vector<8x128xf32>
    %448 = tpu.reciprocal %447 {approx = true} : vector<8x128xf32> -> vector<8x128xf32>
    %449 = arith.mulf %445, %448 : vector<8x128xf32>
    %450 = math.sqrt %449 : vector<8x128xf32>
    %cst_165 = arith.constant -2.000000e+00 : f32
    %451 = vector.broadcast %cst_165 : f32 to vector<8x128xf32>
    %452 = arith.mulf %451, %450 : vector<8x128xf32>
    %cst_166 = arith.constant 0.0174532924 : f32
    %453 = vector.broadcast %cst_166 : f32 to vector<8x128xf32>
    %454 = arith.mulf %441, %453 : vector<8x128xf32>
    %cst_167 = arith.constant 2.000000e+00 : f32
    %455 = vector.broadcast %cst_167 : f32 to vector<8x128xf32>
    %456 = arith.mulf %455, %454 : vector<8x128xf32>
    %457 = math.sin %456 : vector<8x128xf32>
    %458 = arith.mulf %452, %457 : vector<8x128xf32>
    %cst_168 = arith.constant 1.000000e+00 : f32
    %459 = vector.broadcast %cst_168 : f32 to vector<8x128xf32>
    %460 = arith.mulf %402, %459 : vector<8x128xf32>
    %461 = tpu.reciprocal %422 {approx = true} : vector<8x128xf32> -> vector<8x128xf32>
    %462 = arith.mulf %460, %461 : vector<8x128xf32>
    %cst_169 = arith.constant 1.000000e+00 : f32
    %463 = vector.broadcast %cst_169 : f32 to vector<8x128xf32>
    %464 = arith.mulf %403, %463 : vector<8x128xf32>
    %465 = tpu.reciprocal %426 {approx = true} : vector<8x128xf32> -> vector<8x128xf32>
    %466 = arith.mulf %464, %465 : vector<8x128xf32>
    %cst_170 = arith.constant 1.000000e+00 : f32
    %467 = vector.broadcast %cst_170 : f32 to vector<8x128xf32>
    %468 = arith.mulf %411, %467 : vector<8x128xf32>
    %469 = tpu.reciprocal %431 {approx = true} : vector<8x128xf32> -> vector<8x128xf32>
    %470 = arith.mulf %468, %469 : vector<8x128xf32>
    %471 = arith.mulf %462, %462 : vector<8x128xf32>
    %472 = arith.mulf %466, %466 : vector<8x128xf32>
    %473 = arith.addf %471, %472 : vector<8x128xf32>
    %474 = arith.mulf %470, %470 : vector<8x128xf32>
    %475 = arith.addf %473, %474 : vector<8x128xf32>
    %476 = arith.mulf %458, %466 : vector<8x128xf32>
    %477 = arith.mulf %476, %470 : vector<8x128xf32>
    %478 = arith.addf %475, %477 : vector<8x128xf32>
    %479 = math.sqrt %478 : vector<8x128xf32>
    %480 = arith.addf %0, %479 : vector<8x128xf32>
    %c1_i32 = arith.constant 1 : i32
    %481 = vector.shape_cast %480 : vector<8x128xf32> to vector<1x1x8x128xf32>
    %c0_171 = arith.constant 0 : index
    %c0_172 = arith.constant 0 : index
    %c0_173 = arith.constant 0 : index
    %c0_174 = arith.constant 0 : index
    %482 = vector.load %arg4[%c0_171, %c0_172, %c0_173, %c0_174] : memref<1x1x8x128xf32, #tpu.memory_space<vmem>>, vector<1x1x8x128xf32>
    tpu.vector_store %arg4[%c0_171, %c0_172, %c0_173, %c0_174], %481 {strides = array<i32>} : memref<1x1x8x128xf32, #tpu.memory_space<vmem>>, vector<1x1x8x128xf32>,
    return
  }
  func.func @transform_0(%arg0: i32, %arg1: i32) -> (i32, i32, i32, i32) {
    %c0_i32 = arith.constant 0 : i32
    %c0_i32_0 = arith.constant 0 : i32
    %c0_i32_1 = arith.constant 0 : i32
    return %arg0, %c0_i32, %arg1, %c0_i32_0 : i32, i32, i32, i32
  }
  func.func @transform_1(%arg0: i32, %arg1: i32) -> (i32, i32, i32, i32) {
    %c0_i32 = arith.constant 0 : i32
    %c0_i32_0 = arith.constant 0 : i32
    %c0_i32_1 = arith.constant 0 : i32
    return %arg0, %c0_i32, %arg1, %c0_i32_0 : i32, i32, i32, i32
  }
  func.func @transform_2(%arg0: i32, %arg1: i32) -> (i32, i32, i32, i32) {
    %c0_i32 = arith.constant 0 : i32
    %c0_i32_0 = arith.constant 0 : i32
    %c0_i32_1 = arith.constant 0 : i32
    return %arg0, %arg1, %c0_i32, %c0_i32_0 : i32, i32, i32, i32
  }
}

</mosaic_0001>

<llo_original>
// kernel: tpu_custom_call.1
$region0: #{tpu_custom_call.1}
  #allocation0 [shape = 'u32[]', space=smem, size = 0x4, offset = 0x4, fixed_abs, tag = 'smem constant byte address 0x4 - core index']
  #allocation1 [shape = 'u32[72,128]{1,0:T(1,128)}', space=vmem, size = 0x9000, scoped, tag = 'internal scratch']
  %s0 = inlined_call_operand.hbm [shape: f32[2,3,8,128], index: 0, kind: input, shape index: {}]
  %s1 = inlined_call_operand.hbm [shape: f32[2,3,8,128], index: 1, kind: input, shape index: {}]
  %s2 = inlined_call_operand.hbm [shape: f32[2,1,8,128], index: 2, kind: output, shape index: {}]
  %s3 = sld [smem:[#allocation0]]
  $region49: #{tpu_custom_call.1} parent=0
    _
  %s5 = ssub.s32 1, %s3
  %s6 = scalar_select 0, %s5, %s3
  $region1: #{tpu_custom_call.1} parent=0
    #allocation2 [shape = 'u8[24576]{0}', space=vmem, size = 0x6000, scoped, tag = 'input window, operand 0']
    #allocation3 [shape = 's32[2]{0}', space=sflag, size = 0x8, scoped, tag = 'scoped memory for tpu_custom_call.1']
    #allocation4 [shape = 's32[2]{0}', space=sflag, size = 0x8, scoped, tag = 'scoped memory for tpu_custom_call.1']
    #allocation5 [shape = 'u8[24576]{0}', space=vmem, size = 0x6000, scoped, tag = 'input window, operand 1']
    #allocation6 [shape = 's32[2]{0}', space=sflag, size = 0x8, scoped, tag = 'scoped memory for tpu_custom_call.1']
    #allocation7 [shape = 'u8[8192]{0}', space=vmem, size = 0x2000, scoped, tag = 'output window, operand 0']
    %7 = vsyncpa [#allocation3], 0
    %s8 = scalar_lea.sflag [#allocation3], 1
    %9 = vsyncpa %s8, 0
    %10 = vsyncpa [#allocation6], 0
    %s11 = scalar_lea.sflag [#allocation6], 1
    %12 = vsyncpa %s11, 0
    %13 = vsyncpa [#allocation4], 0
    %s14 = scalar_lea.sflag [#allocation4], 1
    %15 = vsyncpa %s14, 0
    loop: start=0, step=1, limit=4
    $region2: #{tpu_custom_call.1} parent=1 // loop_pre_header
      _
    $region3: #{tpu_custom_call.1} parent=1 // loop_header
      %s17 = sphi 0, %s21
      %p18 = scmp.ge.s32.totalorder %s17, 4
      %s24 = sphi 0, %s36
      %s25 = sphi 0, %s32
      %s26 = sphi 0, %s24
      %s27 = sphi 0, %s25
      %s28 = sphi 0, %s26
      %s29 = sphi 0, %s27
      %s41 = sphi 0, %s43
      %s44 = sphi 0, %s41
      %s45 = sphi 0, %s44
      %s61 = sphi 0, %s45
      %s69 = sphi 0, %s71
      %s72 = sphi 0, %s69
      %s73 = sphi 0, %s72
      %s89 = sphi 0, %s73
      %s97 = sphi 0, %s99
      %s100 = sphi 0, %s97
      %s101 = sphi 0, %s100
      %s117 = sphi 0, %s101
    $region4: #{tpu_custom_call.1} parent=1 // loop_header_branch
      %20 = sbr.rel (%p18) target = $region8
    $region5: #{tpu_custom_call.1} parent=1 // loop_body
      %s22 = ssub.s32 %s17, 1
      %s23 = ssub.s32 %s17, 2
      %s30 = sadd.s32 1, %s25
      %p31 = scmp.ge.s32.totalorder %s30, 1
      %s32 = scalar_select %p31, 0, %s30
      %s33 = sadd.s32 1, %s24
      %s34 = scalar_select %p31, %s33, %s24
      %p35 = scmp.ge.s32.totalorder %s34, 2
      %s36 = scalar_select %p35, 0, %s34
      %s37 = ssub.s32 %s24, %s36
      %s38 = ssub.s32 %s25, %s32
      %s39 = sor.u32 %s37, %s38
      %p40 = scmp.eq.s32.totalorder %s39, 0
      %s42 = sadd.s32 %s41, 1
      %s43 = scalar_select %p40, %s41, %s42
      %p46 = pneg %p40
      %p47 = scmp.eq.s32.totalorder %s17, 1
      %p48 = por %p46, %p47
      %p49 = scmp.ne.s32.totalorder %s41, %s44
      %p50 = scmp.eq.s32.totalorder %s17, 0
      %p51 = por %p49, %p50
      %p52 = scmp.ne.s32.totalorder %s41, %s44
      %p53 = scmp.eq.s32.totalorder %s22, 1
      %p54 = por %p52, %p53
      %p55 = scmp.ne.s32.totalorder %s44, %s45
      %p56 = scmp.eq.s32.totalorder %s22, 0
      %p57 = por %p55, %p56
      %p58 = scmp.ne.s32.totalorder %s44, %s45
      %p59 = scmp.eq.s32.totalorder %s23, 1
      %p60 = por %p58, %p59
      %p62 = scmp.ne.s32.totalorder %s45, %s61
      %p63 = scmp.eq.s32.totalorder %s23, 0
      %p64 = por %p62, %p63
      %s65 = ssub.s32 %s24, %s36
      %s66 = ssub.s32 %s25, %s32
      %s67 = sor.u32 %s65, %s66
      %p68 = scmp.eq.s32.totalorder %s67, 0
      %s70 = sadd.s32 %s69, 1
      %s71 = scalar_select %p68, %s69, %s70
      %p74 = pneg %p68
      %p75 = scmp.eq.s32.totalorder %s17, 1
      %p76 = por %p74, %p75
      %p77 = scmp.ne.s32.totalorder %s69, %s72
      %p78 = scmp.eq.s32.totalorder %s17, 0
      %p79 = por %p77, %p78
      %p80 = scmp.ne.s32.totalorder %s69, %s72
      %p81 = scmp.eq.s32.totalorder %s22, 1
      %p82 = por %p80, %p81
      %p83 = scmp.ne.s32.totalorder %s72, %s73
      %p84 = scmp.eq.s32.totalorder %s22, 0
      %p85 = por %p83, %p84
      %p86 = scmp.ne.s32.totalorder %s72, %s73
      %p87 = scmp.eq.s32.totalorder %s23, 1
      %p88 = por %p86, %p87
      %p90 = scmp.ne.s32.totalorder %s73, %s89
      %p91 = scmp.eq.s32.totalorder %s23, 0
      %p92 = por %p90, %p91
      %s93 = ssub.s32 %s24, %s36
      %s94 = ssub.s32 %s25, %s32
      %s95 = sor.u32 %s93, %s94
      %p96 = scmp.eq.s32.totalorder %s95, 0
      %s98 = sadd.s32 %s97, 1
      %s99 = scalar_select %p96, %s97, %s98
      %p102 = pneg %p96
      %p103 = scmp.eq.s32.totalorder %s17, 1
      %p104 = por %p102, %p103
      %p105 = scmp.ne.s32.totalorder %s97, %s100
      %p106 = scmp.eq.s32.totalorder %s17, 0
      %p107 = por %p105, %p106
      %p108 = scmp.ne.s32.totalorder %s97, %s100
      %p109 = scmp.eq.s32.totalorder %s22, 1
      %p110 = por %p108, %p109
      %p111 = scmp.ne.s32.totalorder %s100, %s101
      %p112 = scmp.eq.s32.totalorder %s22, 0
      %p113 = por %p111, %p112
      %p114 = scmp.ne.s32.totalorder %s100, %s101
      %p115 = scmp.eq.s32.totalorder %s23, 1
      %p116 = por %p114, %p115
      %p118 = scmp.ne.s32.totalorder %s101, %s117
      %p119 = scmp.eq.s32.totalorder %s23, 0
      %p120 = por %p118, %p119
      %p121 = scmp.le.s32.totalorder 1, %s17
      %p122 = scmp.lt.s32.totalorder %s17, 3
      %p123 = pnand %p121, %p122
      %p124 = pneg %p123
      // Predicated region
      $region9: #{tpu_custom_call.1} parent=5 // pred_check
        _
      $region10: #{tpu_custom_call.1} parent=5 // pred_check_branch
        %126 = sbr.rel (%p123) target = $region12
      $region11: #{tpu_custom_call.1} parent=5 // pred_region
        %s127 = ssub.s32 %s17, 1
      $region12: #{tpu_custom_call.1} parent=5 // pred_fallthru
        _
      %p128 = scmp.lt.s32.totalorder %s17, 2
      // Predicated region
      $region13: #{tpu_custom_call.1} parent=5 // pred_check
        %p129 = pneg %p128
      $region14: #{tpu_custom_call.1} parent=5 // pred_check_branch
        %131 = sbr.rel (%p129) target = $region16
      $region15: #{tpu_custom_call.1} parent=5 // pred_region
        // Predicated region
        $region17: #{tpu_custom_call.1} parent=15 // pred_check
          %p132 = pneg %p51
        $region18: #{tpu_custom_call.1} parent=15 // pred_check_branch
          %134 = sbr.rel (%p132) target = $region20
        $region19: #{tpu_custom_call.1} parent=15 // pred_region
          %s135 = sand.u32 %s41, 1
          %s136 = scalar_lea.sflag [#allocation3], %s135
          %s137 = sand.u32 %s41, 1
          %s138 = smul.addr %s137, 24
          %s139 = scalar_lea.vmem [#allocation2], %s138
          %141 = vsyncadd %s136, 0
          %s142 = smul.addr %s24, 3
          %s143 = sadd.s32 %s25, %s142
          %s144 = smul.addr %s143, 8
          %s145 = scalar_lea.hbm %s0, %s144
          %s146 = sshll.u32 %s145, 4
          %s147 = int_to_ptr.hbm [resolvable:$true] %s146
          %s148 = sshll.u32 %s139, 4
          %s149 = int_to_ptr.vmem [resolvable:$true] %s148
          %154 = dma.hbm_to_vmem [thread:$0]  %s147, 384, %s149, %s136, 128, 128, 8
        $region20: #{tpu_custom_call.1} parent=15 // pred_fallthru
          _
        // Predicated region
        $region21: #{tpu_custom_call.1} parent=15 // pred_check
          %p155 = pneg %p79
        $region22: #{tpu_custom_call.1} parent=15 // pred_check_branch
          %157 = sbr.rel (%p155) target = $region24
        $region23: #{tpu_custom_call.1} parent=15 // pred_region
          %s158 = sand.u32 %s69, 1
          %s159 = scalar_lea.sflag [#allocation6], %s158
          %s160 = sand.u32 %s69, 1
          %s161 = smul.addr %s160, 24
          %s162 = scalar_lea.vmem [#allocation5], %s161
          %164 = vsyncadd %s159, 0
          %s165 = smul.addr %s24, 3
          %s166 = sadd.s32 %s25, %s165
          %s167 = smul.addr %s166, 8
          %s168 = scalar_lea.hbm %s1, %s167
          %s169 = sshll.u32 %s168, 4
          %s170 = int_to_ptr.hbm [resolvable:$true] %s169
          %s171 = sshll.u32 %s162, 4
          %s172 = int_to_ptr.vmem [resolvable:$true] %s171
          %177 = dma.hbm_to_vmem [thread:$0]  %s170, 384, %s172, %s159, 128, 128, 8
        $region24: #{tpu_custom_call.1} parent=15 // pred_fallthru
          _
      $region16: #{tpu_custom_call.1} parent=5 // pred_fallthru
        _
      %p178 = scmp.le.s32.totalorder 1, %s17
      %p179 = scmp.lt.s32.totalorder %s17, 3
      %p180 = pnand %p178, %p179
      %p181 = pneg %p180
      // Predicated region
      $region25: #{tpu_custom_call.1} parent=5 // pred_check
        _
      $region26: #{tpu_custom_call.1} parent=5 // pred_check_branch
        %183 = sbr.rel (%p180) target = $region28
      $region27: #{tpu_custom_call.1} parent=5 // pred_region
        %s184 = ssub.s32 %s17, 1
        %s185 = sand.u32 %s44, 1
        %s186 = scalar_lea.sflag [#allocation3], %s185
        %s187 = sand.u32 %s44, 1
        %s188 = smul.addr %s187, 24
        %s189 = scalar_lea.vmem [#allocation2], %s188
        // Predicated region
        $region29: #{tpu_custom_call.1} parent=27 // pred_check
          %p190 = pneg %p57
        $region30: #{tpu_custom_call.1} parent=27 // pred_check_branch
          %192 = sbr.rel (%p190) target = $region32
        $region31: #{tpu_custom_call.1} parent=27 // pred_region
          %194 = dma.done %s186, 384
        $region32: #{tpu_custom_call.1} parent=27 // pred_fallthru
          _
        %s195 = sand.u32 %s72, 1
        %s196 = scalar_lea.sflag [#allocation6], %s195
        %s197 = sand.u32 %s72, 1
        %s198 = smul.addr %s197, 24
        %s199 = scalar_lea.vmem [#allocation5], %s198
        // Predicated region
        $region33: #{tpu_custom_call.1} parent=27 // pred_check
          %p200 = pneg %p85
        $region34: #{tpu_custom_call.1} parent=27 // pred_check_branch
          %202 = sbr.rel (%p200) target = $region36
        $region35: #{tpu_custom_call.1} parent=27 // pred_region
          %204 = dma.done %s196, 384
        $region36: #{tpu_custom_call.1} parent=27 // pred_fallthru
          _
        %s205 = sand.u32 %s44, 1
        %s206 = scalar_lea.sflag [#allocation3], %s205
        %s207 = sand.u32 %s44, 1
        %s208 = smul.addr %s207, 24
        %s209 = scalar_lea.vmem [#allocation2], %s208
        %p210 = pneg %p57
        %p211 = pneg %p54
        %s212 = sand.u32 %s72, 1
        %s213 = scalar_lea.sflag [#allocation6], %s212
        %s214 = sand.u32 %s72, 1
        %s215 = smul.addr %s214, 24
        %s216 = scalar_lea.vmem [#allocation5], %s215
        %p217 = pneg %p85
        %p218 = pneg %p82
        %p219 = pneg %p113
        %p220 = pneg %p110
        %s221 = sand.u32 %s100, 1
        %s222 = scalar_lea.sflag [#allocation4], %s221
        %s223 = sand.u32 %s100, 1
        %s224 = smul.addr %s223, 8
        %s225 = scalar_lea.vmem [#allocation7], %s224
        %v226 = vld [vmem:[%s189] sm:$0xff]
        %s227 = sadd.s32 0, 8
        %s228 = scalar_lea.vmem %s189, %s227 [#allocation2]
        %v229 = vld [vmem:[%s228] sm:$0xff]
        %s230 = sadd.s32 0, 16
        %s231 = scalar_lea.vmem %s189, %s230 [#allocation2]
        %v232 = vld [vmem:[%s231] sm:$0xff]
        %v233 = vld [vmem:[%s199] sm:$0xff]
        %s234 = scalar_lea.vmem %s199, %s227 [#allocation5]
        %v235 = vld [vmem:[%s234] sm:$0xff]
        %s236 = scalar_lea.vmem %s199, %s230 [#allocation5]
        %v237 = vld [vmem:[%s236] sm:$0xff]
        %v238 = vadd.f32 %v226, 0.055
        %v239 = vmul.f32 %v238, 0.9478673
        %v240 = vmax.f32 %v239, 1e-12
        %v241 = vlog2.pop %v240
        %v242 = vmul.f32 %v241, 0.6931472
        %v243 = vmul.f32 %v242, 2.4
        %v244 = vmul.f32 %v243, 1.442695
        %v245 = vpow.pop %v244
        %vm246 = vcmp.gt.f32.partialorder %v226, 0.04045
        %v247 = vmul.f32 %v226, 0.07739938
        %v248 = vsel %vm246, %v245, %v247
        %v249 = vadd.f32 %v229, 0.055
        %v250 = vmul.f32 %v249, 0.9478673
        %v251 = vmax.f32 %v250, 1e-12
        %v252 = vlog2.pop %v251
        %v253 = vmul.f32 %v252, 0.6931472
        %v254 = vmul.f32 %v253, 2.4
        %v255 = vmul.f32 %v254, 1.442695
        %v256 = vpow.pop %v255
        %vm257 = vcmp.gt.f32.partialorder %v229, 0.04045
        %v258 = vmul.f32 %v229, 0.07739938
        %v259 = vsel %vm257, %v256, %v258
        %v260 = vadd.f32 %v232, 0.055
        %v261 = vmul.f32 %v260, 0.9478673
        %v262 = vmax.f32 %v261, 1e-12
        %v263 = vlog2.pop %v262
        %v264 = vmul.f32 %v263, 0.6931472
        %v265 = vmul.f32 %v264, 2.4
        %v266 = vmul.f32 %v265, 1.442695
        %v267 = vpow.pop %v266
        %vm268 = vcmp.gt.f32.partialorder %v232, 0.04045
        %v269 = vmul.f32 %v232, 0.07739938
        %v270 = vsel %vm268, %v267, %v269
        %v271 = vmul.f32 %v248, 0.412453
        %v272 = vmul.f32 %v259, 0.35758
        %v273 = vadd.f32 %v271, %v272
        %v274 = vmul.f32 %v270, 0.180423
        %v275 = vadd.f32 %v273, %v274
        %v276 = vmul.f32 %v248, 0.212671
        %v277 = vmul.f32 %v259, 0.71516
        %v278 = vadd.f32 %v276, %v277
        %v279 = vmul.f32 %v270, 0.072169
        %v280 = vadd.f32 %v278, %v279
        %v281 = vmul.f32 %v248, 0.019334
        %v282 = vmul.f32 %v259, 0.119193
        %v283 = vadd.f32 %v281, %v282
        %v284 = vmul.f32 %v270, 0.950227
        %v285 = vadd.f32 %v283, %v284
        %v286 = vmul.f32 %v275, 1.052111
        %v287 = vmax.f32 %v286, 0.008856
        %v288 = vlog2.pop %v287
        %v289 = vmul.f32 %v288, 0.6931472
        %v290 = vmul.f32 %v289, 0.33333334
        %v291 = vmul.f32 %v290, 1.442695
        %v292 = vpow.pop %v291
        %vm293 = vcmp.gt.f32.partialorder %v286, 0.008856
        %v294 = vmul.f32 %v286, 7.787
        %v295 = vadd.f32 %v294, 0.13793103
        %v296 = vsel %vm293, %v292, %v295
        %v297 = vmax.f32 %v280, 0.008856
        %v298 = vlog2.pop %v297
        %v299 = vmul.f32 %v298, 0.6931472
        %v300 = vmul.f32 %v299, 0.33333334
        %v301 = vmul.f32 %v300, 1.442695
        %v302 = vpow.pop %v301
        %vm303 = vcmp.gt.f32.partialorder %v280, 0.008856
        %v304 = vmul.f32 %v280, 7.787
        %v305 = vadd.f32 %v304, 0.13793103
        %v306 = vsel %vm303, %v302, %v305
        %v307 = vmul.f32 %v285, 0.91841704
        %v308 = vmax.f32 %v307, 0.008856
        %v309 = vlog2.pop %v308
        %v310 = vmul.f32 %v309, 0.6931472
        %v311 = vmul.f32 %v310, 0.33333334
        %v312 = vmul.f32 %v311, 1.442695
        %v313 = vpow.pop %v312
        %vm314 = vcmp.gt.f32.partialorder %v307, 0.008856
        %v315 = vmul.f32 %v307, 7.787
        %v316 = vadd.f32 %v315, 0.13793103
        %v317 = vsel %vm314, %v313, %v316
        %v318 = vmul.f32 %v306, 116.0
        %v319 = vsub.f32 %v318, 16.0
        %v320 = vsub.f32 %v296, %v306
        %v321 = vmul.f32 %v320, 500.0
        %v322 = vsub.f32 %v306, %v317
        %v323 = vmul.f32 %v322, 200.0
        %v324 = vadd.f32 %v233, 0.055
        %v325 = vmul.f32 %v324, 0.9478673
        %v326 = vmax.f32 %v325, 1e-12
        %v327 = vlog2.pop %v326
        %v328 = vmul.f32 %v327, 0.6931472
        %v329 = vmul.f32 %v328, 2.4
        %v330 = vmul.f32 %v329, 1.442695
        %v331 = vpow.pop %v330
        %vm332 = vcmp.gt.f32.partialorder %v233, 0.04045
        %v333 = vmul.f32 %v233, 0.07739938
        %v334 = vsel %vm332, %v331, %v333
        %v335 = vadd.f32 %v235, 0.055
        %v336 = vmul.f32 %v335, 0.9478673
        %v337 = vmax.f32 %v336, 1e-12
        %v338 = vlog2.pop %v337
        %v339 = vmul.f32 %v338, 0.6931472
        %v340 = vmul.f32 %v339, 2.4
        %v341 = vmul.f32 %v340, 1.442695
        %v342 = vpow.pop %v341
        %vm343 = vcmp.gt.f32.partialorder %v235, 0.04045
        %v344 = vmul.f32 %v235, 0.07739938
        %v345 = vsel %vm343, %v342, %v344
        %v346 = vadd.f32 %v237, 0.055
        %v347 = vmul.f32 %v346, 0.9478673
        %v348 = vmax.f32 %v347, 1e-12
        %v349 = vlog2.pop %v348
        %v350 = vmul.f32 %v349, 0.6931472
        %v351 = vmul.f32 %v350, 2.4
        %v352 = vmul.f32 %v351, 1.442695
        %v353 = vpow.pop %v352
        %vm354 = vcmp.gt.f32.partialorder %v237, 0.04045
        %v355 = vmul.f32 %v237, 0.07739938
        %v356 = vsel %vm354, %v353, %v355
        %v357 = vmul.f32 %v334, 0.412453
        %v358 = vmul.f32 %v345, 0.35758
        %v359 = vadd.f32 %v357, %v358
        %v360 = vmul.f32 %v356, 0.180423
        %v361 = vadd.f32 %v359, %v360
        %v362 = vmul.f32 %v334, 0.212671
        %v363 = vmul.f32 %v345, 0.71516
        %v364 = vadd.f32 %v362, %v363
        %v365 = vmul.f32 %v356, 0.072169
        %v366 = vadd.f32 %v364, %v365
        %v367 = vmul.f32 %v334, 0.019334
        %v368 = vmul.f32 %v345, 0.119193
        %v369 = vadd.f32 %v367, %v368
        %v370 = vmul.f32 %v356, 0.950227
        %v371 = vadd.f32 %v369, %v370
        %v372 = vmul.f32 %v361, 1.052111
        %v373 = vmax.f32 %v372, 0.008856
        %v374 = vlog2.pop %v373
        %v375 = vmul.f32 %v374, 0.6931472
        %v376 = vmul.f32 %v375, 0.33333334
        %v377 = vmul.f32 %v376, 1.442695
        %v378 = vpow.pop %v377
        %vm379 = vcmp.gt.f32.partialorder %v372, 0.008856
        %v380 = vmul.f32 %v372, 7.787
        %v381 = vadd.f32 %v380, 0.13793103
        %v382 = vsel %vm379, %v378, %v381
        %v383 = vmax.f32 %v366, 0.008856
        %v384 = vlog2.pop %v383
        %v385 = vmul.f32 %v384, 0.6931472
        %v386 = vmul.f32 %v385, 0.33333334
        %v387 = vmul.f32 %v386, 1.442695
        %v388 = vpow.pop %v387
        %vm389 = vcmp.gt.f32.partialorder %v366, 0.008856
        %v390 = vmul.f32 %v366, 7.787
        %v391 = vadd.f32 %v390, 0.13793103
        %v392 = vsel %vm389, %v388, %v391
        %v393 = vmul.f32 %v371, 0.91841704
        %v394 = vmax.f32 %v393, 0.008856
        %v395 = vlog2.pop %v394
        %v396 = vmul.f32 %v395, 0.6931472
        %v397 = vmul.f32 %v396, 0.33333334
        %v398 = vmul.f32 %v397, 1.442695
        %v399 = vpow.pop %v398
        %vm400 = vcmp.gt.f32.partialorder %v393, 0.008856
        %v401 = vmul.f32 %v393, 7.787
        %v402 = vadd.f32 %v401, 0.13793103
        %v403 = vsel %vm400, %v399, %v402
        %v404 = vmul.f32 %v392, 116.0
        %v405 = vsub.f32 %v404, 16.0
        %v406 = vsub.f32 %v382, %v392
        %v407 = vmul.f32 %v406, 500.0
        %v408 = vsub.f32 %v392, %v403
        %v409 = vmul.f32 %v408, 200.0
        %v410 = vadd.f32 %v319, %v405
        %v411 = vmul.f32 %v410, 0.5
        %v412 = vmul.f32 %v321, %v321
        %v413 = vmul.f32 %v323, %v323
        %v414 = vadd.f32 %v412, %v413
        %v415 = vrsqrt.pop %v414
        %v416 = vmul.f32 %v415, %v414
        %v417 = vmul.f32 %v416, %v415
        %v418 = vmul.f32 0.5, %v417
        %v419 = vsub.f32 1.5, %v418
        %v420 = vmul.f32 %v415, %v419
        %v421 = vmul.f32 %v414, %v420
        %vm422 = vcmp.eq.f32.partialorder %v414, inf
        %v423 = vsel %vm422, %v414, %v421
        %vm424 = vcmp.eq.f32.partialorder %v414, 0.0
        %v425 = vand.u32 %v414, 2147483648
        %v426 = vsel %vm424, %v425, %v423
        %v427 = vmul.f32 %v407, %v407
        %v428 = vmul.f32 %v409, %v409
        %v429 = vadd.f32 %v427, %v428
        %v430 = vrsqrt.pop %v429
        %v431 = vmul.f32 %v430, %v429
        %v432 = vmul.f32 %v431, %v430
        %v433 = vmul.f32 0.5, %v432
        %v434 = vsub.f32 1.5, %v433
        %v435 = vmul.f32 %v430, %v434
        %v436 = vmul.f32 %v429, %v435
        %vm437 = vcmp.eq.f32.partialorder %v429, inf
        %v438 = vsel %vm437, %v429, %v436
        %vm439 = vcmp.eq.f32.partialorder %v429, 0.0
        %v440 = vand.u32 %v429, 2147483648
        %v441 = vsel %vm439, %v440, %v438
        %v442 = vadd.f32 %v426, %v441
        %v443 = vmul.f32 %v442, 0.5
        %v444 = vmul.f32 %v443, %v443
        %v445 = vmul.f32 %v443, %v444
        %v446 = vmul.f32 %v444, %v444
        %v447 = vmul.f32 %v445, %v446
        %v448 = vadd.f32 %v447, 6.1035156e+09
        %v449 = vrcp.pop %v448
        %v450 = vmul.f32 %v447, %v449
        %v451 = vadd.f32 %v450, 1e-08
        %v452 = vrsqrt.pop %v451
        %v453 = vmul.f32 %v452, %v451
        %v454 = vmul.f32 %v453, %v452
        %v455 = vmul.f32 0.5, %v454
        %v456 = vsub.f32 1.5, %v455
        %v457 = vmul.f32 %v452, %v456
        %v458 = vmul.f32 %v451, %v457
        %vm459 = vcmp.eq.f32.partialorder %v451, inf
        %v460 = vsel %vm459, %v451, %v458
        %vm461 = vcmp.eq.f32.partialorder %v451, 0.0
        %v462 = vand.u32 %v451, 2147483648
        %v463 = vsel %vm461, %v462, %v460
        %v464 = vsub.f32 1.0, %v463
        %v465 = vmul.f32 %v464, 0.5
        %v466 = vadd.f32 %v465, 1.0
        %v467 = vmul.f32 %v321, %v466
        %v468 = vmul.f32 %v407, %v466
        %v469 = vmul.f32 %v467, %v467
        %v470 = vadd.f32 %v469, %v413
        %v471 = vrsqrt.pop %v470
        %v472 = vmul.f32 %v471, %v470
        %v473 = vmul.f32 %v472, %v471
        %v474 = vmul.f32 0.5, %v473
        %v475 = vsub.f32 1.5, %v474
        %v476 = vmul.f32 %v471, %v475
        %v477 = vmul.f32 %v470, %v476
        %vm478 = vcmp.eq.f32.partialorder %v470, inf
        %v479 = vsel %vm478, %v470, %v477
        %vm480 = vcmp.eq.f32.partialorder %v470, 0.0
        %v481 = vand.u32 %v470, 2147483648
        %v482 = vsel %vm480, %v481, %v479
        %v483 = vmul.f32 %v468, %v468
        %v484 = vadd.f32 %v483, %v428
        %v485 = vrsqrt.pop %v484
        %v486 = vmul.f32 %v485, %v484
        %v487 = vmul.f32 %v486, %v485
        %v488 = vmul.f32 0.5, %v487
        %v489 = vsub.f32 1.5, %v488
        %v490 = vmul.f32 %v485, %v489
        %v491 = vmul.f32 %v484, %v490
        %vm492 = vcmp.eq.f32.partialorder %v484, inf
        %v493 = vsel %vm492, %v484, %v491
        %vm494 = vcmp.eq.f32.partialorder %v484, 0.0
        %v495 = vand.u32 %v484, 2147483648
        %v496 = vsel %vm494, %v495, %v493
        %v497 = vadd.f32 %v482, %v496
        %v498 = vmul.f32 %v497, 0.5
        %v499 = vand.u32 2147483647, %v467
        %v500 = vand.u32 2147483647, %v323
        %v501 = vmin.f32 %v499, %v500
        %v502 = vmax.f32 %v499, %v500
        %v503 = vrcp.pop %v502
        %v504 = vmul.f32 %v502, %v503
        %v505 = vsub.f32 1.0, %v504
        %v506 = vmul.f32 %v503, %v505
        %v507 = vadd.f32 %v503, %v506
        %vm508 = vweird.f32 %v502
        %vm509 = vweird.f32 %v503
        %vm510 = vmor %vm508, %vm509
        %v511 = vsel %vm510, %v503, %v507
        %v512 = vand.u32 2147483647, %v502
        %vm513 = vcmp.eq.f32.partialorder %v512, 8.507059e+37
        %v514 = vand.u32 %v502, 2147483648
        %v515 = vor.u32 1.1754944e-38, %v514
        %v516 = vsel %vm513, %v515, %v511
        %v517 = vmul.f32 %v501, %v516
        %v518 = vmul.f32 %v517, %v517
        %v519 = vmul.f32 0.002785687, %v518
        %v520 = vadd.f32 %v519, -0.015866
        %v521 = vmul.f32 %v520, %v518
        %v522 = vadd.f32 %v521, 0.04247222
        %v523 = vmul.f32 %v522, %v518
        %v524 = vadd.f32 %v523, -0.074975304
        %v525 = vmul.f32 %v524, %v518
        %v526 = vadd.f32 %v525, 0.1064488
        %v527 = vmul.f32 %v526, %v518
        %v528 = vadd.f32 %v527, -0.14207031
        %v529 = vmul.f32 %v528, %v518
        %v530 = vadd.f32 %v529, 0.19993454
        %v531 = vmul.f32 %v530, %v518
        %v532 = vadd.f32 %v531, -0.33333147
        %v533 = vmul.f32 %v532, %v518
        %v534 = vmul.f32 %v533, %v517
        %v535 = vadd.f32 %v534, %v517
        %vm536 = vcmp.gt.f32.partialorder %v500, %v499
        %v537 = vsub.f32 1.5707964, %v535
        %v538 = vsel %vm536, %v537, %v535
        %vm539 = vcmp.lt.f32.partialorder %v467, 0.0
        %v540 = vsub.f32 3.1415927, %v538
        %v541 = vsel %vm539, %v540, %v538
        %vm542 = vcmp.lt.s32.totalorder %v467, 0
        %v543 = vsel %vm542, 3.1415927, 0.0
        %vm544 = vcmp.eq.f32.partialorder %v323, 0.0
        %v545 = vsel %vm544, %v543, %v541
        %vm546 = vcmp.ne.f32.partialorder %v467, %v467
        %vm547 = vcmp.ne.f32.partialorder %v323, %v323
        %vm548 = vmor %vm546, %vm547
        %v549 = vsel %vm548, nan, %v545
        %vm550 = vcmp.lt.f32.partialorder %v467, 0.0
        %v551 = vsel %vm550, 2.3561945, 0.7853982
        %vm552 = vcmp.eq.s32.totalorder %v499, inf
        %vm553 = vcmp.eq.s32.totalorder %v500, inf
        %vm554 = vmand %vm552, %vm553
        %v555 = vsel %vm554, %v551, %v549
        %v556 = vand.u32 2147483647, %v555
        %v557 = vand.u32 %v323, 2147483648
        %v558 = vor.u32 %v556, %v557
        %v559 = vmul.f32 %v558, 57.29578
        %vm560 = vcmp.lt.f32.partialorder %v559, 0.0
        %v561 = vadd.f32 %v559, 360.0
        %v562 = vsel %vm560, %v561, %v559
        %v563 = vand.u32 2147483647, %v468
        %v564 = vand.u32 2147483647, %v409
        %v565 = vmin.f32 %v563, %v564
        %v566 = vmax.f32 %v563, %v564
        %v567 = vrcp.pop %v566
        %v568 = vmul.f32 %v566, %v567
        %v569 = vsub.f32 1.0, %v568
        %v570 = vmul.f32 %v567, %v569
        %v571 = vadd.f32 %v567, %v570
        %vm572 = vweird.f32 %v566
        %vm573 = vweird.f32 %v567
        %vm574 = vmor %vm572, %vm573
        %v575 = vsel %vm574, %v567, %v571
        %v576 = vand.u32 2147483647, %v566
        %vm577 = vcmp.eq.f32.partialorder %v576, 8.507059e+37
        %v578 = vand.u32 %v566, 2147483648
        %v579 = vor.u32 1.1754944e-38, %v578
        %v580 = vsel %vm577, %v579, %v575
        %v581 = vmul.f32 %v565, %v580
        %v582 = vmul.f32 %v581, %v581
        %v583 = vmul.f32 0.002785687, %v582
        %v584 = vadd.f32 %v583, -0.015866
        %v585 = vmul.f32 %v584, %v582
        %v586 = vadd.f32 %v585, 0.04247222
        %v587 = vmul.f32 %v586, %v582
        %v588 = vadd.f32 %v587, -0.074975304
        %v589 = vmul.f32 %v588, %v582
        %v590 = vadd.f32 %v589, 0.1064488
        %v591 = vmul.f32 %v590, %v582
        %v592 = vadd.f32 %v591, -0.14207031
        %v593 = vmul.f32 %v592, %v582
        %v594 = vadd.f32 %v593, 0.19993454
        %v595 = vmul.f32 %v594, %v582
        %v596 = vadd.f32 %v595, -0.33333147
        %v597 = vmul.f32 %v596, %v582
        %v598 = vmul.f32 %v597, %v581
        %v599 = vadd.f32 %v598, %v581
        %vm600 = vcmp.gt.f32.partialorder %v564, %v563
        %v601 = vsub.f32 1.5707964, %v599
        %v602 = vsel %vm600, %v601, %v599
        %vm603 = vcmp.lt.f32.partialorder %v468, 0.0
        %v604 = vsub.f32 3.1415927, %v602
        %v605 = vsel %vm603, %v604, %v602
        %vm606 = vcmp.lt.s32.totalorder %v468, 0
        %v607 = vsel %vm606, 3.1415927, 0.0
        %vm608 = vcmp.eq.f32.partialorder %v409, 0.0
        %v609 = vsel %vm608, %v607, %v605
        %vm610 = vcmp.ne.f32.partialorder %v468, %v468
        %vm611 = vcmp.ne.f32.partialorder %v409, %v409
        %vm612 = vmor %vm610, %vm611
        %v613 = vsel %vm612, nan, %v609
        %vm614 = vcmp.lt.f32.partialorder %v468, 0.0
        %v615 = vsel %vm614, 2.3561945, 0.7853982
        %vm616 = vcmp.eq.s32.totalorder %v563, inf
        %vm617 = vcmp.eq.s32.totalorder %v564, inf
        %vm618 = vmand %vm616, %vm617
        %v619 = vsel %vm618, %v615, %v613
        %v620 = vand.u32 2147483647, %v619
        %v621 = vand.u32 %v409, 2147483648
        %v622 = vor.u32 %v620, %v621
        %v623 = vmul.f32 %v622, 57.29578
        %vm624 = vcmp.lt.f32.partialorder %v623, 0.0
        %v625 = vadd.f32 %v623, 360.0
        %v626 = vsel %vm624, %v625, %v623
        %v627 = vadd.f32 %v562, %v626
        %v628 = vsub.f32 %v562, %v626
        %v629 = vand.u32 2147483647, %v628
        %vm630 = vcmp.gt.f32.partialorder %v629, 180.0
        %v631 = vadd.f32 %v627, 360.0
        %v632 = vsel %vm630, %v631, %v627
        %v633 = vmul.f32 %v632, 0.5
        %v634 = vmul.f32 %v633, 0.017453292
        %v635 = vand.u32 2147483647, %v634
        %vm636 = vcmp.le.f32.partialorder %v635, 0.7853982
        %vm637 = vcmp.lt.s32.totalorder %v634, 0
        %v638 = vand.u32 %v634, 2139095040
        %v639 = vshrl.u32 %v638, 23
        %v640 = vsub.s32 %v639, 127
        %v641 = vand.u32 2147483647, %v634
        %v642 = vand.u32 %v641, 8388607
        %v643 = vor.u32 %v642, 8388608
        %v644 = vsub.s32 0, %v643
        %v645 = vadd.s32 %v640, 1
        %vm646 = vcmp.gt.s32.totalorder %v645, 0
        %v647 = vsel %vm646, %v645, 0
        %v648 = vshrl.u32 %v647, 5
        %v649 = vand.u32 %v647, 31
        %v650 = vsub.s32 32, %v649
        %v651 = vshrl.u32 683565275, %v650
        %v652 = vshll.u32 683565275, %v649
        %v653 = vshrl.u32 2475754826, %v650
        %v654 = vor.u32 %v652, %v653
        %v655 = vshll.u32 2475754826, %v649
        %v656 = vshrl.u32 2131351028, %v650
        %v657 = vor.u32 %v655, %v656
        %v658 = vshll.u32 2131351028, %v649
        %v659 = vshrl.u32 2102212464, %v650
        %v660 = vor.u32 %v658, %v659
        %v661 = vshll.u32 2102212464, %v649
        %v662 = vshrl.u32 920167782, %v650
        %v663 = vor.u32 %v661, %v662
        %v664 = vshll.u32 920167782, %v649
        %v665 = vshrl.u32 1326507024, %v650
        %v666 = vor.u32 %v664, %v665
        %vm667 = vcmp.lt.s32.totalorder %v648, 1
        %vm668 = vcmp.lt.s32.totalorder %v648, 2
        %vm669 = vcmp.lt.s32.totalorder %v648, 3
        %vm670 = vcmp.lt.s32.totalorder %v648, 4
        %v671 = vsel %vm667, %v651, %v654
        %v672 = vsel %vm670, %v660, 2102212464
        %v673 = vsel %vm669, %v657, %v672
        %v674 = vsel %vm668, %v671, %v673
        %v675 = vsel %vm667, %v654, %v657
        %v676 = vsel %vm670, %v663, 920167782
        %v677 = vsel %vm669, %v660, %v676
        %v678 = vsel %vm668, %v675, %v677
        %v679 = vsel %vm667, %v657, %v660
        %v680 = vsel %vm670, %v666, 1326507024
        %v681 = vsel %vm669, %v663, %v680
        %v682 = vsel %vm668, %v679, %v681
        %v683 = vshll.u32 %v643, 8
        %v684 = vand.u32 %v683, 65535
        %v685 = vshrl.u32 %v683, 16
        %v686 = vand.u32 %v682, 65535
        %v687 = vshrl.u32 %v682, 16
        %v688 = vmul.u32 %v684, %v686
        %v689 = vmul.u32 %v684, %v687
        %v690 = vmul.u32 %v685, %v686
        %v691 = vmul.u32 %v685, %v687
        %v692 = vshll.u32 %v689, 16
        %v693 = vshrl.u32 %v689, 16
        %v694 = vshll.u32 %v690, 16
        %v695 = vshrl.u32 %v690, 16
        %vm696 = vc.u32 %v688, %v692
        %v697 = vsel %vm696, 1, 0
        %v698 = vadd.s32 %v688, %v692
        %v699 = vadd.s32 %v691, %v697
        %vm700 = vc.u32 %v698, %v694
        %v701 = vsel %vm700, 1, 0
        %v702 = vadd.s32 %v698, %v694
        %v703 = vadd.s32 %v699, %v701
        %v704 = vadd.s32 %v703, %v693
        %v705 = vadd.s32 %v704, %v695
        %v706 = vand.u32 %v683, 65535
        %v707 = vshrl.u32 %v683, 16
        %v708 = vand.u32 %v678, 65535
        %v709 = vshrl.u32 %v678, 16
        %v710 = vmul.u32 %v706, %v708
        %v711 = vmul.u32 %v706, %v709
        %v712 = vmul.u32 %v707, %v708
        %v713 = vmul.u32 %v707, %v709
        %v714 = vshll.u32 %v711, 16
        %v715 = vshrl.u32 %v711, 16
        %v716 = vshll.u32 %v712, 16
        %v717 = vshrl.u32 %v712, 16
        %vm718 = vc.u32 %v710, %v714
        %v719 = vsel %vm718, 1, 0
        %v720 = vadd.s32 %v710, %v714
        %v721 = vadd.s32 %v713, %v719
        %vm722 = vc.u32 %v720, %v716
        %v723 = vsel %vm722, 1, 0
        %v724 = vadd.s32 %v720, %v716
        %v725 = vadd.s32 %v721, %v723
        %v726 = vadd.s32 %v725, %v715
        %v727 = vadd.s32 %v726, %v717
        %v728 = vmul.u32 %v683, %v674
        %v729 = vadd.s32 %v705, %v724
        %vm730 = vc.u32 %v705, %v724
        %v731 = vadd.s32 %v727, 1
        %v732 = vsel %vm730, %v731, %v727
        %v733 = vadd.s32 %v728, %v732
        %v734 = vadd.s32 %v733, 536870912
        %v735 = vshrl.u32 %v734, 30
        %v736 = vshll.u32 %v735, 30
        %v737 = vsub.s32 %v733, %v736
        %vm738 = vcmp.lt.s32.totalorder %v737, 0
        %v739 = vsub.s32 0, %v737
        %v740 = vsel %vm738, %v739, %v737
        %v741 = vclz %v740
        %v742 = vsub.s32 %v741, 2
        %vm743 = vcmp.gt.s32.totalorder 0, %v742
        %v744 = vsel %vm743, 0, %v742
        %v745 = vsub.s32 32, %v744
        %v746 = vshll.u32 %v737, %v744
        %v747 = vshrl.u32 %v729, %v745
        %v748 = vor.u32 %v746, %v747
        %v749 = vsub.s32 4294967266, %v744
        %v750 = vadd.s32 %v749, 127
        %v751 = vshll.u32 %v750, 23
        %v752 = vor.u32 4788187, %v751
        %v753 = vand.u32 2147483647, %v752
        %v755 = vcvt.s32.f32 %v748
        %v756 = vmul.f32 %v755, %v753
        %v757 = vxor.u32 %v756, 2147483648
        %v758 = vsel %vm637, %v757, %v756
        %v759 = vsub.s32 4, %v735
        %v760 = vsel %vm637, %v759, %v735
        %v761 = vsel %vm636, %v634, %v758
        %v762 = vsel %vm636, 0, %v760
        %v763 = vmul.f32 %v761, %v761
        %v764 = vmul.f32 %v763, -0.001358992
        %v765 = vadd.f32 %v764, 0.041655596
        %v766 = vmul.f32 %v763, %v765
        %v767 = vadd.f32 %v766, -0.4999988
        %v768 = vmul.f32 %v763, %v767
        %v769 = vadd.f32 1.0, %v768
        %v770 = vmul.f32 %v761, %v761
        %v771 = vmul.f32 %v770, -0.00019511016
        %v772 = vadd.f32 %v771, 0.008332121
        %v773 = vmul.f32 %v770, %v772
        %v774 = vadd.f32 %v773, -0.16666654
        %v775 = vmul.f32 %v770, %v774
        %v776 = vadd.f32 %v775, 1.0
        %v777 = vmul.f32 %v776, %v761
        %vm778 = vweird.f32 %v634
        %v779 = vand.u32 %v762, 3
        %vm780 = vcmp.lt.s32.totalorder %v779, 2
        %vm781 = vcmp.eq.s32.totalorder %v779, 0
        %v782 = vxor.u32 %v777, 2147483648
        %v783 = vsel %vm781, %v769, %v782
        %vm784 = vcmp.eq.s32.totalorder %v779, 2
        %v785 = vxor.u32 %v769, 2147483648
        %v786 = vsel %vm784, %v785, %v777
        %v787 = vsel %vm780, %v783, %v786
        %v788 = vsel %vm778, nan, %v787
        %v789 = vand.u32 2147483647, %v634
        %vm790 = vcmp.le.f32.partialorder %v789, 0.7853982
        %vm791 = vcmp.lt.s32.totalorder %v634, 0
        %v792 = vand.u32 %v634, 2139095040
        %v793 = vshrl.u32 %v792, 23
        %v794 = vsub.s32 %v793, 127
        %v795 = vand.u32 2147483647, %v634
        %v796 = vand.u32 %v795, 8388607
        %v797 = vor.u32 %v796, 8388608
        %v798 = vsub.s32 0, %v797
        %v799 = vadd.s32 %v794, 1
        %vm800 = vcmp.gt.s32.totalorder %v799, 0
        %v801 = vsel %vm800, %v799, 0
        %v802 = vshrl.u32 %v801, 5
        %v803 = vand.u32 %v801, 31
        %v804 = vsub.s32 32, %v803
        %v805 = vshrl.u32 683565275, %v804
        %v806 = vshll.u32 683565275, %v803
        %v807 = vshrl.u32 2475754826, %v804
        %v808 = vor.u32 %v806, %v807
        %v809 = vshll.u32 2475754826, %v803
        %v810 = vshrl.u32 2131351028, %v804
        %v811 = vor.u32 %v809, %v810
        %v812 = vshll.u32 2131351028, %v803
        %v813 = vshrl.u32 2102212464, %v804
        %v814 = vor.u32 %v812, %v813
        %v815 = vshll.u32 2102212464, %v803
        %v816 = vshrl.u32 920167782, %v804
        %v817 = vor.u32 %v815, %v816
        %v818 = vshll.u32 920167782, %v803
        %v819 = vshrl.u32 1326507024, %v804
        %v820 = vor.u32 %v818, %v819
        %vm821 = vcmp.lt.s32.totalorder %v802, 1
        %vm822 = vcmp.lt.s32.totalorder %v802, 2
        %vm823 = vcmp.lt.s32.totalorder %v802, 3
        %vm824 = vcmp.lt.s32.totalorder %v802, 4
        %v825 = vsel %vm821, %v805, %v808
        %v826 = vsel %vm824, %v814, 2102212464
        %v827 = vsel %vm823, %v811, %v826
        %v828 = vsel %vm822, %v825, %v827
        %v829 = vsel %vm821, %v808, %v811
        %v830 = vsel %vm824, %v817, 920167782
        %v831 = vsel %vm823, %v814, %v830
        %v832 = vsel %vm822, %v829, %v831
        %v833 = vsel %vm821, %v811, %v814
        %v834 = vsel %vm824, %v820, 1326507024
        %v835 = vsel %vm823, %v817, %v834
        %v836 = vsel %vm822, %v833, %v835
        %v837 = vshll.u32 %v797, 8
        %v838 = vand.u32 %v837, 65535
        %v839 = vshrl.u32 %v837, 16
        %v840 = vand.u32 %v836, 65535
        %v841 = vshrl.u32 %v836, 16
        %v842 = vmul.u32 %v838, %v840
        %v843 = vmul.u32 %v838, %v841
        %v844 = vmul.u32 %v839, %v840
        %v845 = vmul.u32 %v839, %v841
        %v846 = vshll.u32 %v843, 16
        %v847 = vshrl.u32 %v843, 16
        %v848 = vshll.u32 %v844, 16
        %v849 = vshrl.u32 %v844, 16
        %vm850 = vc.u32 %v842, %v846
        %v851 = vsel %vm850, 1, 0
        %v852 = vadd.s32 %v842, %v846
        %v853 = vadd.s32 %v845, %v851
        %vm854 = vc.u32 %v852, %v848
        %v855 = vsel %vm854, 1, 0
        %v856 = vadd.s32 %v852, %v848
        %v857 = vadd.s32 %v853, %v855
        %v858 = vadd.s32 %v857, %v847
        %v859 = vadd.s32 %v858, %v849
        %v860 = vand.u32 %v837, 65535
        %v861 = vshrl.u32 %v837, 16
        %v862 = vand.u32 %v832, 65535
        %v863 = vshrl.u32 %v832, 16
        %v864 = vmul.u32 %v860, %v862
        %v865 = vmul.u32 %v860, %v863
        %v866 = vmul.u32 %v861, %v862
        %v867 = vmul.u32 %v861, %v863
        %v868 = vshll.u32 %v865, 16
        %v869 = vshrl.u32 %v865, 16
        %v870 = vshll.u32 %v866, 16
        %v871 = vshrl.u32 %v866, 16
        %vm872 = vc.u32 %v864, %v868
        %v873 = vsel %vm872, 1, 0
        %v874 = vadd.s32 %v864, %v868
        %v875 = vadd.s32 %v867, %v873
        %vm876 = vc.u32 %v874, %v870
        %v877 = vsel %vm876, 1, 0
        %v878 = vadd.s32 %v874, %v870
        %v879 = vadd.s32 %v875, %v877
        %v880 = vadd.s32 %v879, %v869
        %v881 = vadd.s32 %v880, %v871
        %v882 = vmul.u32 %v837, %v828
        %v883 = vadd.s32 %v859, %v878
        %vm884 = vc.u32 %v859, %v878
        %v885 = vadd.s32 %v881, 1
        %v886 = vsel %vm884, %v885, %v881
        %v887 = vadd.s32 %v882, %v886
        %v888 = vadd.s32 %v887, 536870912
        %v889 = vshrl.u32 %v888, 30
        %v890 = vshll.u32 %v889, 30
        %v891 = vsub.s32 %v887, %v890
        %vm892 = vcmp.lt.s32.totalorder %v891, 0
        %v893 = vsub.s32 0, %v891
        %v894 = vsel %vm892, %v893, %v891
        %v895 = vclz %v894
        %v896 = vsub.s32 %v895, 2
        %vm897 = vcmp.gt.s32.totalorder 0, %v896
        %v898 = vsel %vm897, 0, %v896
        %v899 = vsub.s32 32, %v898
        %v900 = vshll.u32 %v891, %v898
        %v901 = vshrl.u32 %v883, %v899
        %v902 = vor.u32 %v900, %v901
        %v903 = vsub.s32 4294967266, %v898
        %v904 = vadd.s32 %v903, 127
        %v905 = vshll.u32 %v904, 23
        %v906 = vor.u32 4788187, %v905
        %v907 = vand.u32 2147483647, %v906
        %v909 = vcvt.s32.f32 %v902
        %v910 = vmul.f32 %v909, %v907
        %v911 = vxor.u32 %v910, 2147483648
        %v912 = vsel %vm791, %v911, %v910
        %v913 = vsub.s32 4, %v889
        %v914 = vsel %vm791, %v913, %v889
        %v915 = vsel %vm790, %v634, %v912
        %v916 = vsel %vm790, 0, %v914
        %v917 = vmul.f32 %v915, %v915
        %v918 = vmul.f32 %v917, -0.001358992
        %v919 = vadd.f32 %v918, 0.041655596
        %v920 = vmul.f32 %v917, %v919
        %v921 = vadd.f32 %v920, -0.4999988
        %v922 = vmul.f32 %v917, %v921
        %v923 = vadd.f32 1.0, %v922
        %v924 = vmul.f32 %v915, %v915
        %v925 = vmul.f32 %v924, -0.00019511016
        %v926 = vadd.f32 %v925, 0.008332121
        %v927 = vmul.f32 %v924, %v926
        %v928 = vadd.f32 %v927, -0.16666654
        %v929 = vmul.f32 %v924, %v928
        %v930 = vadd.f32 %v929, 1.0
        %v931 = vmul.f32 %v930, %v915
        %vm932 = vweird.f32 %v634
        %v933 = vadd.s32 %v916, 3
        %v934 = vand.u32 %v933, 3
        %vm935 = vcmp.lt.s32.totalorder %v934, 2
        %vm936 = vcmp.eq.s32.totalorder %v934, 0
        %v937 = vxor.u32 %v931, 2147483648
        %v938 = vsel %vm936, %v923, %v937
        %vm939 = vcmp.eq.s32.totalorder %v934, 2
        %v940 = vxor.u32 %v923, 2147483648
        %v941 = vsel %vm939, %v940, %v931
        %v942 = vsel %vm935, %v938, %v941
        %v943 = vsel %vm932, nan, %v942
        %v944 = vmul.f32 %v788, 2.0
        %v945 = vmul.f32 %v944, %v788
        %v946 = vsub.f32 %v945, 1.0
        %v947 = vmul.f32 %v943, 2.0
        %v948 = vmul.f32 %v947, %v788
        %v949 = vmul.f32 %v946, %v788
        %v950 = vmul.f32 %v948, %v943
        %v951 = vsub.f32 %v949, %v950
        %v952 = vmul.f32 %v948, %v788
        %v953 = vmul.f32 %v946, %v943
        %v954 = vadd.f32 %v952, %v953
        %v955 = vmul.f32 %v946, 2.0
        %v956 = vmul.f32 %v955, %v946
        %v957 = vsub.f32 %v956, 1.0
        %v958 = vmul.f32 %v948, 2.0
        %v959 = vmul.f32 %v958, %v946
        %v960 = vmul.f32 %v788, 0.8660254
        %v961 = vmul.f32 %v943, 0.5
        %v962 = vadd.f32 %v960, %v961
        %v963 = vmul.f32 %v962, 0.17
        %v964 = vsub.f32 1.0, %v963
        %v965 = vmul.f32 %v946, 0.24
        %v966 = vadd.f32 %v964, %v965
        %v967 = vmul.f32 %v951, 0.9945219
        %v968 = vmul.f32 %v954, 0.104528464
        %v969 = vsub.f32 %v967, %v968
        %v970 = vmul.f32 %v969, 0.32
        %v971 = vadd.f32 %v966, %v970
        %v972 = vmul.f32 %v957, 0.4539905
        %v973 = vmul.f32 %v959, 0.8910065
        %v974 = vadd.f32 %v972, %v973
        %v975 = vmul.f32 %v974, 0.2
        %v976 = vsub.f32 %v971, %v975
        %v977 = vsub.f32 %v626, %v562
        %v978 = vand.u32 2147483647, %v977
        %vm979 = vcmp.gt.f32.partialorder %v978, 180.0
        %v980 = vadd.f32 %v977, 360.0
        %v981 = vsel %vm979, %v980, %v977
        %vm982 = vcmp.gt.f32.partialorder %v626, %v562
        %v983 = vsub.f32 %v981, 720.0
        %v984 = vsel %vm982, %v983, %v981
        %v985 = vsub.f32 %v405, %v319
        %v986 = vsub.f32 %v496, %v482
        %v987 = vmul.f32 %v482, %v496
        %v988 = vrsqrt.pop %v987
        %v989 = vmul.f32 %v988, %v987
        %v990 = vmul.f32 %v989, %v988
        %v991 = vmul.f32 0.5, %v990
        %v992 = vsub.f32 1.5, %v991
        %v993 = vmul.f32 %v988, %v992
        %v994 = vmul.f32 %v987, %v993
        %vm995 = vcmp.eq.f32.partialorder %v987, inf
        %v996 = vsel %vm995, %v987, %v994
        %vm997 = vcmp.eq.f32.partialorder %v987, 0.0
        %v998 = vand.u32 %v987, 2147483648
        %v999 = vsel %vm997, %v998, %v996
        %v1000 = vmul.f32 %v999, 2.0
        %v1001 = vmul.f32 %v984, 0.008726646
        %v1002 = vand.u32 2147483647, %v1001
        %vm1003 = vcmp.le.f32.partialorder %v1002, 0.7853982
        %vm1004 = vcmp.lt.s32.totalorder %v1001, 0
        %v1005 = vand.u32 %v1001, 2139095040
        %v1006 = vshrl.u32 %v1005, 23
        %v1007 = vsub.s32 %v1006, 127
        %v1008 = vand.u32 2147483647, %v1001
        %v1009 = vand.u32 %v1008, 8388607
        %v1010 = vor.u32 %v1009, 8388608
        %v1011 = vsub.s32 0, %v1010
        %v1012 = vadd.s32 %v1007, 1
        %vm1013 = vcmp.gt.s32.totalorder %v1012, 0
        %v1014 = vsel %vm1013, %v1012, 0
        %v1015 = vshrl.u32 %v1014, 5
        %v1016 = vand.u32 %v1014, 31
        %v1017 = vsub.s32 32, %v1016
        %v1018 = vshrl.u32 683565275, %v1017
        %v1019 = vshll.u32 683565275, %v1016
        %v1020 = vshrl.u32 2475754826, %v1017
        %v1021 = vor.u32 %v1019, %v1020
        %v1022 = vshll.u32 2475754826, %v1016
        %v1023 = vshrl.u32 2131351028, %v1017
        %v1024 = vor.u32 %v1022, %v1023
        %v1025 = vshll.u32 2131351028, %v1016
        %v1026 = vshrl.u32 2102212464, %v1017
        %v1027 = vor.u32 %v1025, %v1026
        %v1028 = vshll.u32 2102212464, %v1016
        %v1029 = vshrl.u32 920167782, %v1017
        %v1030 = vor.u32 %v1028, %v1029
        %v1031 = vshll.u32 920167782, %v1016
        %v1032 = vshrl.u32 1326507024, %v1017
        %v1033 = vor.u32 %v1031, %v1032
        %vm1034 = vcmp.lt.s32.totalorder %v1015, 1
        %vm1035 = vcmp.lt.s32.totalorder %v1015, 2
        %vm1036 = vcmp.lt.s32.totalorder %v1015, 3
        %vm1037 = vcmp.lt.s32.totalorder %v1015, 4
        %v1038 = vsel %vm1034, %v1018, %v1021
        %v1039 = vsel %vm1037, %v1027, 2102212464
        %v1040 = vsel %vm1036, %v1024, %v1039
        %v1041 = vsel %vm1035, %v1038, %v1040
        %v1042 = vsel %vm1034, %v1021, %v1024
        %v1043 = vsel %vm1037, %v1030, 920167782
        %v1044 = vsel %vm1036, %v1027, %v1043
        %v1045 = vsel %vm1035, %v1042, %v1044
        %v1046 = vsel %vm1034, %v1024, %v1027
        %v1047 = vsel %vm1037, %v1033, 1326507024
        %v1048 = vsel %vm1036, %v1030, %v1047
        %v1049 = vsel %vm1035, %v1046, %v1048
        %v1050 = vshll.u32 %v1010, 8
        %v1051 = vand.u32 %v1050, 65535
        %v1052 = vshrl.u32 %v1050, 16
        %v1053 = vand.u32 %v1049, 65535
        %v1054 = vshrl.u32 %v1049, 16
        %v1055 = vmul.u32 %v1051, %v1053
        %v1056 = vmul.u32 %v1051, %v1054
        %v1057 = vmul.u32 %v1052, %v1053
        %v1058 = vmul.u32 %v1052, %v1054
        %v1059 = vshll.u32 %v1056, 16
        %v1060 = vshrl.u32 %v1056, 16
        %v1061 = vshll.u32 %v1057, 16
        %v1062 = vshrl.u32 %v1057, 16
        %vm1063 = vc.u32 %v1055, %v1059
        %v1064 = vsel %vm1063, 1, 0
        %v1065 = vadd.s32 %v1055, %v1059
        %v1066 = vadd.s32 %v1058, %v1064
        %vm1067 = vc.u32 %v1065, %v1061
        %v1068 = vsel %vm1067, 1, 0
        %v1069 = vadd.s32 %v1065, %v1061
        %v1070 = vadd.s32 %v1066, %v1068
        %v1071 = vadd.s32 %v1070, %v1060
        %v1072 = vadd.s32 %v1071, %v1062
        %v1073 = vand.u32 %v1050, 65535
        %v1074 = vshrl.u32 %v1050, 16
        %v1075 = vand.u32 %v1045, 65535
        %v1076 = vshrl.u32 %v1045, 16
        %v1077 = vmul.u32 %v1073, %v1075
        %v1078 = vmul.u32 %v1073, %v1076
        %v1079 = vmul.u32 %v1074, %v1075
        %v1080 = vmul.u32 %v1074, %v1076
        %v1081 = vshll.u32 %v1078, 16
        %v1082 = vshrl.u32 %v1078, 16
        %v1083 = vshll.u32 %v1079, 16
        %v1084 = vshrl.u32 %v1079, 16
        %vm1085 = vc.u32 %v1077, %v1081
        %v1086 = vsel %vm1085, 1, 0
        %v1087 = vadd.s32 %v1077, %v1081
        %v1088 = vadd.s32 %v1080, %v1086
        %vm1089 = vc.u32 %v1087, %v1083
        %v1090 = vsel %vm1089, 1, 0
        %v1091 = vadd.s32 %v1087, %v1083
        %v1092 = vadd.s32 %v1088, %v1090
        %v1093 = vadd.s32 %v1092, %v1082
        %v1094 = vadd.s32 %v1093, %v1084
        %v1095 = vmul.u32 %v1050, %v1041
        %v1096 = vadd.s32 %v1072, %v1091
        %vm1097 = vc.u32 %v1072, %v1091
        %v1098 = vadd.s32 %v1094, 1
        %v1099 = vsel %vm1097, %v1098, %v1094
        %v1100 = vadd.s32 %v1095, %v1099
        %v1101 = vadd.s32 %v1100, 536870912
        %v1102 = vshrl.u32 %v1101, 30
        %v1103 = vshll.u32 %v1102, 30
        %v1104 = vsub.s32 %v1100, %v1103
        %vm1105 = vcmp.lt.s32.totalorder %v1104, 0
        %v1106 = vsub.s32 0, %v1104
        %v1107 = vsel %vm1105, %v1106, %v1104
        %v1108 = vclz %v1107
        %v1109 = vsub.s32 %v1108, 2
        %vm1110 = vcmp.gt.s32.totalorder 0, %v1109
        %v1111 = vsel %vm1110, 0, %v1109
        %v1112 = vsub.s32 32, %v1111
        %v1113 = vshll.u32 %v1104, %v1111
        %v1114 = vshrl.u32 %v1096, %v1112
        %v1115 = vor.u32 %v1113, %v1114
        %v1116 = vsub.s32 4294967266, %v1111
        %v1117 = vadd.s32 %v1116, 127
        %v1118 = vshll.u32 %v1117, 23
        %v1119 = vor.u32 4788187, %v1118
        %v1120 = vand.u32 2147483647, %v1119
        %v1122 = vcvt.s32.f32 %v1115
        %v1123 = vmul.f32 %v1122, %v1120
        %v1124 = vxor.u32 %v1123, 2147483648
        %v1125 = vsel %vm1004, %v1124, %v1123
        %v1126 = vsub.s32 4, %v1102
        %v1127 = vsel %vm1004, %v1126, %v1102
        %v1128 = vsel %vm1003, %v1001, %v1125
        %v1129 = vsel %vm1003, 0, %v1127
        %v1130 = vmul.f32 %v1128, %v1128
        %v1131 = vmul.f32 %v1130, -0.001358992
        %v1132 = vadd.f32 %v1131, 0.041655596
        %v1133 = vmul.f32 %v1130, %v1132
        %v1134 = vadd.f32 %v1133, -0.4999988
        %v1135 = vmul.f32 %v1130, %v1134
        %v1136 = vadd.f32 1.0, %v1135
        %v1137 = vmul.f32 %v1128, %v1128
        %v1138 = vmul.f32 %v1137, -0.00019511016
        %v1139 = vadd.f32 %v1138, 0.008332121
        %v1140 = vmul.f32 %v1137, %v1139
        %v1141 = vadd.f32 %v1140, -0.16666654
        %v1142 = vmul.f32 %v1137, %v1141
        %v1143 = vadd.f32 %v1142, 1.0
        %v1144 = vmul.f32 %v1143, %v1128
        %vm1145 = vweird.f32 %v1001
        %v1146 = vadd.s32 %v1129, 3
        %v1147 = vand.u32 %v1146, 3
        %vm1148 = vcmp.lt.s32.totalorder %v1147, 2
        %vm1149 = vcmp.eq.s32.totalorder %v1147, 0
        %v1150 = vxor.u32 %v1144, 2147483648
        %v1151 = vsel %vm1149, %v1136, %v1150
        %vm1152 = vcmp.eq.s32.totalorder %v1147, 2
        %v1153 = vxor.u32 %v1136, 2147483648
        %v1154 = vsel %vm1152, %v1153, %v1144
        %v1155 = vsel %vm1148, %v1151, %v1154
        %v1156 = vsel %vm1145, nan, %v1155
        %v1157 = vmul.f32 %v1000, %v1156
        %v1158 = vsub.f32 %v411, 50.0
        %v1159 = vmul.f32 %v1158, %v1158
        %v1160 = vmul.f32 %v1159, 0.015
        %v1161 = vadd.f32 %v1159, 20.0
        %v1162 = vrsqrt.pop %v1161
        %v1163 = vmul.f32 %v1162, %v1161
        %v1164 = vmul.f32 %v1163, %v1162
        %v1165 = vmul.f32 0.5, %v1164
        %v1166 = vsub.f32 1.5, %v1165
        %v1167 = vmul.f32 %v1162, %v1166
        %vm1168 = vweird.f32 %v1161
        %vm1169 = vweird.f32 %v1162
        %vm1170 = vmor %vm1168, %vm1169
        %v1171 = vsel %vm1170, %v1162, %v1167
        %v1172 = vmul.f32 %v1160, %v1171
        %v1173 = vadd.f32 %v1172, 1.0
        %v1174 = vmul.f32 %v498, 0.045
        %v1175 = vadd.f32 %v1174, 1.0
        %v1176 = vmul.f32 %v498, 0.015
        %v1177 = vmul.f32 %v1176, %v976
        %v1178 = vadd.f32 %v1177, 1.0
        %v1179 = vsub.f32 %v633, 275.0
        %v1180 = vmul.f32 %v1179, 0.04
        %v1181 = vmul.f32 %v1180, %v1180
        %v1182 = vsub.f32 0.0, %v1181
        %v1183 = vmul.f32 %v1182, 1.442695
        %v1184 = vpow.pop %v1183
        %v1185 = vmul.f32 %v1184, 30.0
        %v1186 = vmul.f32 %v498, %v498
        %v1187 = vmul.f32 %v498, %v1186
        %v1188 = vmul.f32 %v1186, %v1186
        %v1189 = vmul.f32 %v1187, %v1188
        %v1190 = vadd.f32 %v1189, 6.1035156e+09
        %v1191 = vrcp.pop %v1190
        %v1192 = vmul.f32 %v1189, %v1191
        %v1193 = vrsqrt.pop %v1192
        %v1194 = vmul.f32 %v1193, %v1192
        %v1195 = vmul.f32 %v1194, %v1193
        %v1196 = vmul.f32 0.5, %v1195
        %v1197 = vsub.f32 1.5, %v1196
        %v1198 = vmul.f32 %v1193, %v1197
        %v1199 = vmul.f32 %v1192, %v1198
        %vm1200 = vcmp.eq.f32.partialorder %v1192, inf
        %v1201 = vsel %vm1200, %v1192, %v1199
        %vm1202 = vcmp.eq.f32.partialorder %v1192, 0.0
        %v1203 = vand.u32 %v1192, 2147483648
        %v1204 = vsel %vm1202, %v1203, %v1201
        %v1205 = vmul.f32 %v1204, -2.0
        %v1206 = vmul.f32 %v1185, 0.017453292
        %v1207 = vmul.f32 %v1206, 2.0
        %v1208 = vand.u32 2147483647, %v1207
        %vm1209 = vcmp.le.f32.partialorder %v1208, 0.7853982
        %vm1210 = vcmp.lt.s32.totalorder %v1207, 0
        %v1211 = vand.u32 %v1207, 2139095040
        %v1212 = vshrl.u32 %v1211, 23
        %v1213 = vsub.s32 %v1212, 127
        %v1214 = vand.u32 2147483647, %v1207
        %v1215 = vand.u32 %v1214, 8388607
        %v1216 = vor.u32 %v1215, 8388608
        %v1217 = vsub.s32 0, %v1216
        %v1218 = vadd.s32 %v1213, 1
        %vm1219 = vcmp.gt.s32.totalorder %v1218, 0
        %v1220 = vsel %vm1219, %v1218, 0
        %v1221 = vshrl.u32 %v1220, 5
        %v1222 = vand.u32 %v1220, 31
        %v1223 = vsub.s32 32, %v1222
        %v1224 = vshrl.u32 683565275, %v1223
        %v1225 = vshll.u32 683565275, %v1222
        %v1226 = vshrl.u32 2475754826, %v1223
        %v1227 = vor.u32 %v1225, %v1226
        %v1228 = vshll.u32 2475754826, %v1222
        %v1229 = vshrl.u32 2131351028, %v1223
        %v1230 = vor.u32 %v1228, %v1229
        %v1231 = vshll.u32 2131351028, %v1222
        %v1232 = vshrl.u32 2102212464, %v1223
        %v1233 = vor.u32 %v1231, %v1232
        %v1234 = vshll.u32 2102212464, %v1222
        %v1235 = vshrl.u32 920167782, %v1223
        %v1236 = vor.u32 %v1234, %v1235
        %v1237 = vshll.u32 920167782, %v1222
        %v1238 = vshrl.u32 1326507024, %v1223
        %v1239 = vor.u32 %v1237, %v1238
        %vm1240 = vcmp.lt.s32.totalorder %v1221, 1
        %vm1241 = vcmp.lt.s32.totalorder %v1221, 2
        %vm1242 = vcmp.lt.s32.totalorder %v1221, 3
        %vm1243 = vcmp.lt.s32.totalorder %v1221, 4
        %v1244 = vsel %vm1240, %v1224, %v1227
        %v1245 = vsel %vm1243, %v1233, 2102212464
        %v1246 = vsel %vm1242, %v1230, %v1245
        %v1247 = vsel %vm1241, %v1244, %v1246
        %v1248 = vsel %vm1240, %v1227, %v1230
        %v1249 = vsel %vm1243, %v1236, 920167782
        %v1250 = vsel %vm1242, %v1233, %v1249
        %v1251 = vsel %vm1241, %v1248, %v1250
        %v1252 = vsel %vm1240, %v1230, %v1233
        %v1253 = vsel %vm1243, %v1239, 1326507024
        %v1254 = vsel %vm1242, %v1236, %v1253
        %v1255 = vsel %vm1241, %v1252, %v1254
        %v1256 = vshll.u32 %v1216, 8
        %v1257 = vand.u32 %v1256, 65535
        %v1258 = vshrl.u32 %v1256, 16
        %v1259 = vand.u32 %v1255, 65535
        %v1260 = vshrl.u32 %v1255, 16
        %v1261 = vmul.u32 %v1257, %v1259
        %v1262 = vmul.u32 %v1257, %v1260
        %v1263 = vmul.u32 %v1258, %v1259
        %v1264 = vmul.u32 %v1258, %v1260
        %v1265 = vshll.u32 %v1262, 16
        %v1266 = vshrl.u32 %v1262, 16
        %v1267 = vshll.u32 %v1263, 16
        %v1268 = vshrl.u32 %v1263, 16
        %vm1269 = vc.u32 %v1261, %v1265
        %v1270 = vsel %vm1269, 1, 0
        %v1271 = vadd.s32 %v1261, %v1265
        %v1272 = vadd.s32 %v1264, %v1270
        %vm1273 = vc.u32 %v1271, %v1267
        %v1274 = vsel %vm1273, 1, 0
        %v1275 = vadd.s32 %v1271, %v1267
        %v1276 = vadd.s32 %v1272, %v1274
        %v1277 = vadd.s32 %v1276, %v1266
        %v1278 = vadd.s32 %v1277, %v1268
        %v1279 = vand.u32 %v1256, 65535
        %v1280 = vshrl.u32 %v1256, 16
        %v1281 = vand.u32 %v1251, 65535
        %v1282 = vshrl.u32 %v1251, 16
        %v1283 = vmul.u32 %v1279, %v1281
        %v1284 = vmul.u32 %v1279, %v1282
        %v1285 = vmul.u32 %v1280, %v1281
        %v1286 = vmul.u32 %v1280, %v1282
        %v1287 = vshll.u32 %v1284, 16
        %v1288 = vshrl.u32 %v1284, 16
        %v1289 = vshll.u32 %v1285, 16
        %v1290 = vshrl.u32 %v1285, 16
        %vm1291 = vc.u32 %v1283, %v1287
        %v1292 = vsel %vm1291, 1, 0
        %v1293 = vadd.s32 %v1283, %v1287
        %v1294 = vadd.s32 %v1286, %v1292
        %vm1295 = vc.u32 %v1293, %v1289
        %v1296 = vsel %vm1295, 1, 0
        %v1297 = vadd.s32 %v1293, %v1289
        %v1298 = vadd.s32 %v1294, %v1296
        %v1299 = vadd.s32 %v1298, %v1288
        %v1300 = vadd.s32 %v1299, %v1290
        %v1301 = vmul.u32 %v1256, %v1247
        %v1302 = vadd.s32 %v1278, %v1297
        %vm1303 = vc.u32 %v1278, %v1297
        %v1304 = vadd.s32 %v1300, 1
        %v1305 = vsel %vm1303, %v1304, %v1300
        %v1306 = vadd.s32 %v1301, %v1305
        %v1307 = vadd.s32 %v1306, 536870912
        %v1308 = vshrl.u32 %v1307, 30
        %v1309 = vshll.u32 %v1308, 30
        %v1310 = vsub.s32 %v1306, %v1309
        %vm1311 = vcmp.lt.s32.totalorder %v1310, 0
        %v1312 = vsub.s32 0, %v1310
        %v1313 = vsel %vm1311, %v1312, %v1310
        %v1314 = vclz %v1313
        %v1315 = vsub.s32 %v1314, 2
        %vm1316 = vcmp.gt.s32.totalorder 0, %v1315
        %v1317 = vsel %vm1316, 0, %v1315
        %v1318 = vsub.s32 32, %v1317
        %v1319 = vshll.u32 %v1310, %v1317
        %v1320 = vshrl.u32 %v1302, %v1318
        %v1321 = vor.u32 %v1319, %v1320
        %v1322 = vsub.s32 4294967266, %v1317
        %v1323 = vadd.s32 %v1322, 127
        %v1324 = vshll.u32 %v1323, 23
        %v1325 = vor.u32 4788187, %v1324
        %v1326 = vand.u32 2147483647, %v1325
        %v1328 = vcvt.s32.f32 %v1321
        %v1329 = vmul.f32 %v1328, %v1326
        %v1330 = vxor.u32 %v1329, 2147483648
        %v1331 = vsel %vm1210, %v1330, %v1329
        %v1332 = vsub.s32 4, %v1308
        %v1333 = vsel %vm1210, %v1332, %v1308
        %v1334 = vsel %vm1209, %v1207, %v1331
        %v1335 = vsel %vm1209, 0, %v1333
        %v1336 = vmul.f32 %v1334, %v1334
        %v1337 = vmul.f32 %v1336, -0.001358992
        %v1338 = vadd.f32 %v1337, 0.041655596
        %v1339 = vmul.f32 %v1336, %v1338
        %v1340 = vadd.f32 %v1339, -0.4999988
        %v1341 = vmul.f32 %v1336, %v1340
        %v1342 = vadd.f32 1.0, %v1341
        %v1343 = vmul.f32 %v1334, %v1334
        %v1344 = vmul.f32 %v1343, -0.00019511016
        %v1345 = vadd.f32 %v1344, 0.008332121
        %v1346 = vmul.f32 %v1343, %v1345
        %v1347 = vadd.f32 %v1346, -0.16666654
        %v1348 = vmul.f32 %v1343, %v1347
        %v1349 = vadd.f32 %v1348, 1.0
        %v1350 = vmul.f32 %v1349, %v1334
        %vm1351 = vweird.f32 %v1207
        %v1352 = vadd.s32 %v1335, 3
        %v1353 = vand.u32 %v1352, 3
        %vm1354 = vcmp.lt.s32.totalorder %v1353, 2
        %vm1355 = vcmp.eq.s32.totalorder %v1353, 0
        %v1356 = vxor.u32 %v1350, 2147483648
        %v1357 = vsel %vm1355, %v1342, %v1356
        %vm1358 = vcmp.eq.s32.totalorder %v1353, 2
        %v1359 = vxor.u32 %v1342, 2147483648
        %v1360 = vsel %vm1358, %v1359, %v1350
        %v1361 = vsel %vm1354, %v1357, %v1360
        %v1362 = vsel %vm1351, nan, %v1361
        %v1363 = vmul.f32 %v1205, %v1362
        %v1364 = vrcp.pop %v1173
        %v1365 = vmul.f32 %v985, %v1364
        %v1366 = vrcp.pop %v1175
        %v1367 = vmul.f32 %v986, %v1366
        %v1368 = vrcp.pop %v1178
        %v1369 = vmul.f32 %v1157, %v1368
        %v1370 = vmul.f32 %v1365, %v1365
        %v1371 = vmul.f32 %v1367, %v1367
        %v1372 = vadd.f32 %v1370, %v1371
        %v1373 = vmul.f32 %v1369, %v1369
        %v1374 = vadd.f32 %v1372, %v1373
        %v1375 = vmul.f32 %v1363, %v1367
        %v1376 = vmul.f32 %v1375, %v1369
        %v1377 = vadd.f32 %v1374, %v1376
        %v1378 = vrsqrt.pop %v1377
        %v1379 = vmul.f32 %v1378, %v1377
        %v1380 = vmul.f32 %v1379, %v1378
        %v1381 = vmul.f32 0.5, %v1380
        %v1382 = vsub.f32 1.5, %v1381
        %v1383 = vmul.f32 %v1378, %v1382
        %v1384 = vmul.f32 %v1377, %v1383
        %vm1385 = vcmp.eq.f32.partialorder %v1377, inf
        %v1386 = vsel %vm1385, %v1377, %v1384
        %vm1387 = vcmp.eq.f32.partialorder %v1377, 0.0
        %v1388 = vand.u32 %v1377, 2147483648
        %v1389 = vsel %vm1387, %v1388, %v1386
        %v1390 = vadd.f32 %v1389, 0.0
        %1391 = vst [vmem:[%s225] sm:$0xff] %v1390
        %s1392 = sand.u32 %s100, 1
        %s1393 = scalar_lea.sflag [#allocation4], %s1392
        %s1394 = sand.u32 %s100, 1
        %s1395 = smul.addr %s1394, 8
        %s1396 = scalar_lea.vmem [#allocation7], %s1395
        // Predicated region
        $region37: #{tpu_custom_call.1} parent=27 // pred_check
          %p1397 = pneg %p110
        $region38: #{tpu_custom_call.1} parent=27 // pred_check_branch
          %1399 = sbr.rel (%p1397) target = $region40
        $region39: #{tpu_custom_call.1} parent=27 // pred_region
          %1401 = vsyncadd %s1393, 0
          %s1402 = sadd.s32 %s27, %s26
          %s1403 = smul.addr %s1402, 8
          %s1404 = scalar_lea.hbm %s2, %s1403
          %s1406 = sshll.u32 %s1396, 4
          %s1407 = int_to_ptr.vmem [resolvable:$true] %s1406
          %s1408 = sshll.u32 %s1404, 4
          %s1409 = int_to_ptr.hbm [resolvable:$true] %s1408
          %1411 = dma.vmem_to_hbm [thread:$0]  %s1407, 128, %s1409, %s1393
        $region40: #{tpu_custom_call.1} parent=27 // pred_fallthru
          _
      $region28: #{tpu_custom_call.1} parent=5 // pred_fallthru
        _
      %p1412 = scmp.le.s32.totalorder 2, %s17
      // Predicated region
      $region41: #{tpu_custom_call.1} parent=5 // pred_check
        %p1413 = pneg %p1412
      $region42: #{tpu_custom_call.1} parent=5 // pred_check_branch
        %1415 = sbr.rel (%p1413) target = $region44
      $region43: #{tpu_custom_call.1} parent=5 // pred_region
        %s1416 = ssub.s32 %s17, 2
        // Predicated region
        $region45: #{tpu_custom_call.1} parent=43 // pred_check
          %p1417 = pneg %p116
        $region46: #{tpu_custom_call.1} parent=43 // pred_check_branch
          %1419 = sbr.rel (%p1417) target = $region48
        $region47: #{tpu_custom_call.1} parent=43 // pred_region
          %s1420 = sand.u32 %s101, 1
          %s1421 = scalar_lea.sflag [#allocation4], %s1420
          %s1422 = sand.u32 %s101, 1
          %s1423 = smul.addr %s1422, 8
          %s1424 = scalar_lea.vmem [#allocation7], %s1423
          %1426 = dma.done %s1421, 128
        $region48: #{tpu_custom_call.1} parent=43 // pred_fallthru
          _
      $region44: #{tpu_custom_call.1} parent=5 // pred_fallthru
        _
    $region6: #{tpu_custom_call.1} parent=1 // loop_footer
      %s21 = sadd.s32 1, %s17
    $region7: #{tpu_custom_call.1} parent=1 // loop_footer_branch
      %16 = sbr.rel target = $region3
    $region8: #{tpu_custom_call.1} parent=1 // loop_exit
      _
    %1427 = vsyncpa [#allocation3], 1
    %s1428 = scalar_lea.sflag [#allocation3], 1
    %1429 = vsyncpa %s1428, 1
    %1430 = vsyncpa [#allocation6], 1
    %s1431 = scalar_lea.sflag [#allocation6], 1
    %1432 = vsyncpa %s1431, 1
    %1433 = vsyncpa [#allocation4], 1
    %s1434 = scalar_lea.sflag [#allocation4], 1
    %1435 = vsyncpa %s1434, 1

</llo_original>
